<compile_context>
chip_gen: v7x
topology: tpu7x:2x2x1
jax: 0.10.0
libtpu: 0.0.40
codegen_flags: <defaults>
</compile_context>

<pallas_src>
import functools

import numpy as np
import jax
import jax.numpy as jnp
from jax import lax
from jax.experimental import pallas as pl
from jax.experimental.pallas import tpu as pltpu

OUT_LANES = 128  # lane-dense packed output: [log_probs (nA) | value (1) | zeros]


# ----------------------------------------------------------------------------
# Fused forward kernel
# ----------------------------------------------------------------------------
def _fused_forward_kernel(img_ref, t1_ref, b1_ref, t2_ref, b2_ref, t3_ref, b3_ref,
                          wh1_ref, bh1_ref, wh2_ref, bh2_ref,
                          out_ref, *, n_actions, pool_slab):
    # bf16 MXU operands, f32 accumulation; all elementwise math stays f32.
    dot = lambda a, b: jnp.dot(a.astype(jnp.bfloat16), b,
                               preferred_element_type=jnp.float32)

    x = img_ref[...]                                            # (BB, H*W*3) f32

    # conv1 (2x2, 3->16) as one banded matmul whose output columns are already
    # permuted into 4 pool-window slabs of `pool_slab` lanes each; bias folded.
    y1 = jnp.maximum(dot(x, t1_ref[...]) + b1_ref[...], 0.0)    # (BB, 4*pool_slab)

    # MaxPool2d(2): four 128-lane-aligned slabs -> 3 full-width VPU maxima.
    s0 = y1[:, 0 * pool_slab:1 * pool_slab]
    s1 = y1[:, 1 * pool_slab:2 * pool_slab]
    s2 = y1[:, 2 * pool_slab:3 * pool_slab]
    s3 = y1[:, 3 * pool_slab:4 * pool_slab]
    pooled = jnp.maximum(jnp.maximum(s0, s1), jnp.maximum(s2, s3))  # (BB, pool_slab)

    # conv2 (2x2, 16->32) + ReLU, conv3 (2x2, 32->64) + ReLU (banded matmuls;
    # t2 rows are zero-padded to pool_slab so padded pooled lanes are inert).
    y2 = jnp.maximum(dot(pooled, t2_ref[...]) + b2_ref[...], 0.0)   # (BB, 128)
    emb = jnp.maximum(dot(y2, t3_ref[...]) + b3_ref[...], 0.0)      # (BB, 64)

    # actor1/critic1 fused into one (64,128) matmul + tanh.
    hcat = jnp.tanh(dot(emb, wh1_ref[...]) + bh1_ref[...])          # (BB, 128)
    # TODO(synk): Dropout(0.2) implemented as identity (inference semantics).

    # actor2/critic2 packed block-diagonally: cols [0:nA) actor logits,
    # col nA critic value, remaining cols exactly zero.
    o2 = dot(hcat, wh2_ref[...]) + bh2_ref[...]                     # (BB, 128)

    col = lax.broadcasted_iota(jnp.int32, o2.shape, 1)
    is_logit = col < n_actions
    z = jnp.where(is_logit, o2, -jnp.inf)
    m = jnp.max(z, axis=1, keepdims=True)
    lse = jnp.log(jnp.sum(jnp.exp(z - m), axis=1, keepdims=True)) + m
    # Single full-width lane-dense store: log-probs in [:nA], value in col nA.
    out_ref[...] = jnp.where(is_logit, o2 - lse, o2)


# ----------------------------------------------------------------------------
# Host-side (one-time) parameter packing
# ----------------------------------------------------------------------------
def _conv_as_banded_matrix(w_flat, h, w, cin, cout, kh=2, kw=2):
    """Express a 'valid' kh x kw conv as one (h*w*cin, oh*ow*cout) matrix acting
    on the NHWC-flattened input.  w_flat rows are in (kh, kw, cin) order."""
    oh, ow = h - kh + 1, w - kw + 1
    w4 = np.asarray(w_flat, np.float32).reshape(kh, kw, cin, cout)
    t = np.zeros((h, w, cin, oh, ow, cout), np.float32)
    for i in range(kh):
        for j in range(kw):
            for oi in range(oh):
                for oj in range(ow):
                    t[oi + i, oj + j, :, oi, oj, :] += w4[i, j]
    return t.reshape(h * w * cin, oh * ow * cout)


def pack_for_kernel(params, obs_hw=(7, 7), n_actions=7):
    """Build the lane-dense operands the fused kernel consumes (done once)."""
    h, w = obs_hw
    h1, w1 = h - 1, w - 1            # conv1 output
    ph, pw = h1 // 2, w1 // 2        # after MaxPool2d(2)  (truncating, like torch)
    h2, w2 = ph - 1, pw - 1          # conv2 output
    h3, w3 = h2 - 1, w2 - 1          # conv3 output
    c1, c2, c3 = 16, 32, 64
    assert n_actions + 1 <= OUT_LANES

    pooled_lanes = ph * pw * c1                       # 144 for 7x7 obs
    pool_slab = -(-pooled_lanes // 128) * 128         # pad to 128-lane multiple

    # conv1 banded matrix, columns permuted into 4 pool-window slabs of
    # pool_slab lanes each (slab k=(di,dj) holds conv1[2*pi+di, 2*pj+dj, c]).
    t1_raw = _conv_as_banded_matrix(params["conv1_w"], h, w, 3, c1)   # (hw3, h1*w1*c1)
    b1_raw = np.tile(np.asarray(params["conv1_b"], np.float32), h1 * w1)
    t1 = np.zeros((h * w * 3, 4 * pool_slab), np.float32)
    b1 = np.zeros((4 * pool_slab,), np.float32)
    for di in range(2):
        for dj in range(2):
            k = di * 2 + dj
            for pi in range(ph):
                for pj in range(pw):
                    src = ((2 * pi + di) * w1 + (2 * pj + dj)) * c1
                    dst = k * pool_slab + (pi * pw + pj) * c1
                    t1[:, dst:dst + c1] = t1_raw[:, src:src + c1]
                    b1[dst:dst + c1] = b1_raw[src:src + c1]

    # conv2 banded matrix, rows zero-padded to pool_slab (padded lanes inert).
    t2_raw = _conv_as_banded_matrix(params["conv2_w"], ph, pw, c1, c2)  # (144, 128)
    t2 = np.zeros((pool_slab, h2 * w2 * c2), np.float32)
    t2[:pooled_lanes] = t2_raw
    b2 = np.tile(np.asarray(params["conv2_b"], np.float32), h2 * w2)

    t3 = _conv_as_banded_matrix(params["conv3_w"], h2, w2, c2, c3)      # (128, 64)
    b3 = np.tile(np.asarray(params["conv3_b"], np.float32), h3 * w3)    # (64,)

    # actor1 / critic1 fused into one full-128-lane matmul.
    wh1 = np.concatenate([np.asarray(params["actor1_w"], np.float32),
                          np.asarray(params["critic1_w"], np.float32)], axis=1)
    bh1 = np.concatenate([np.asarray(params["actor1_b"], np.float32),
                          np.asarray(params["critic1_b"], np.float32)])

    # actor2 / critic2 packed block-diagonally into a lane-dense (128,128) weight.
    wh2 = np.zeros((128, OUT_LANES), np.float32)
    wh2[:64, :n_actions] = np.asarray(params["actor2_w"], np.float32)
    wh2[64:, n_actions] = np.asarray(params["critic2_w"], np.float32)[:, 0]
    bh2 = np.zeros((OUT_LANES,), np.float32)
    bh2[:n_actions] = np.asarray(params["actor2_b"], np.float32)
    bh2[n_actions] = np.asarray(params["critic2_b"], np.float32)[0]

    bf16 = lambda a: jnp.asarray(a, jnp.bfloat16)               # MXU operands
    f32row = lambda a: jnp.asarray(a, jnp.float32)[None, :]     # biases stay f32
    weights = dict(t1=bf16(t1), b1=f32row(b1),
                   t2=bf16(t2), b2=f32row(b2),
                   t3=bf16(t3), b3=f32row(b3),
                   wh1=bf16(wh1), bh1=f32row(bh1),
                   wh2=bf16(wh2), bh2=f32row(bh2))
    config = dict(n_actions=n_actions, obs_hw=(h, w), pool_slab=pool_slab)
    return weights, config


# ----------------------------------------------------------------------------
# Forward wrapper
# ----------------------------------------------------------------------------
def acmodel_forward(weights, image, *, config, block_batch=None):
    """image: (B, H, W, 3) float32 NHWC.  Returns (log_probs, value, memory)."""
    nA = config["n_actions"]
    h, w = config["obs_hw"]
    pool_slab = config["pool_slab"]

    B = image.shape[0]
    if block_batch is None:
        # Fill the MXU row dimension (cap 128: already full rows on v5e) while
        # keeping >= 2 grid steps so "parallel" megacore sharding helps on v7x.
        half = (B + 1) // 2
        BB = min(128, max(8, ((half + 7) // 8) * 8))
    else:
        BB = block_batch

    x = image.reshape(B, h * w * 3)   # no padding: Pallas masks the partial block

    names = ("t1", "b1", "t2", "b2", "t3", "b3", "wh1", "bh1", "wh2", "bh2")
    w_specs = [pl.BlockSpec(weights[n].shape, lambda i: (0, 0)) for n in names]

    kern = functools.partial(_fused_forward_kernel,
                             n_actions=nA, pool_slab=pool_slab)
    out = pl.pallas_call(
        kern,
        out_shape=jax.ShapeDtypeStruct((B, OUT_LANES), jnp.float32),
        grid=(pl.cdiv(B, BB),),
        in_specs=[pl.BlockSpec((BB, h * w * 3), lambda i: (i, 0))] + w_specs,
        out_specs=pl.BlockSpec((BB, OUT_LANES), lambda i: (i, 0)),
        compiler_params=pltpu.CompilerParams(
            dimension_semantics=("parallel",)),
    )(x, *[weights[n] for n in names])

    logp = out[:, :nA]
    value = out[:, nA]
    memory = jnp.zeros((B, 0), jnp.float32)   # use_memory=False -> memory_size 0
    return logp, value, memory


# ----------------------------------------------------------------------------
# Parameters (matching the PyTorch init semantics used by the reference)
# ----------------------------------------------------------------------------
def make_params(key, n_actions):
    ks = jax.random.split(key, 7)

    def conv_init(k, kh, kw, cin, cout):
        w = jax.random.normal(k, (kh * kw * cin, cout), jnp.float32)
        w = w / jnp.sqrt(float(kh * kw * cin))
        return w, jnp.zeros((cout,), jnp.float32)

    def linear_init(k, fin, fout):
        # init_params: N(0,1) normalized over the input dim, zero bias
        w = jax.random.normal(k, (fin, fout), jnp.float32)
        w = w / jnp.sqrt(jnp.sum(w * w, axis=0, keepdims=True))
        return w, jnp.zeros((fout,), jnp.float32)

    c1w, c1b = conv_init(ks[0], 2, 2, 3, 16)
    c2w, c2b = conv_init(ks[1], 2, 2, 16, 32)
    c3w, c3b = conv_init(ks[2], 2, 2, 32, 64)
    a1w, a1b = linear_init(ks[3], 64, 64)
    a2w, a2b = linear_init(ks[4], 64, n_actions)
    v1w, v1b = linear_init(ks[5], 64, 64)
    v2w, v2b = linear_init(ks[6], 64, 1)
    return dict(
        conv1_w=c1w, conv1_b=c1b, conv2_w=c2w, conv2_b=c2b, conv3_w=c3w, conv3_b=c3b,
        actor1_w=a1w, actor1_b=a1b, actor2_w=a2w, actor2_b=a2b,
        critic1_w=v1w, critic1_b=v1b, critic2_w=v2w, critic2_b=v2b,
    )


# ----------------------------------------------------------------------------
# Pure-JAX reference (correctness check, all f32)
# ----------------------------------------------------------------------------
def im2col(x, kh, kw):
    B, H, W, C = x.shape
    oh, ow = H - kh + 1, W - kw + 1
    patches = [x[:, i:i + oh, j:j + ow, :] for i in range(kh) for j in range(kw)]
    p = jnp.stack(patches, axis=3)
    return p.reshape(B * oh * ow, kh * kw * C), oh, ow


def reference_forward(params, image):
    def conv_relu(x, w, b):
        p, oh, ow = im2col(x, 2, 2)
        return jnp.maximum(p @ w + b, 0.0).reshape(x.shape[0], oh, ow, -1)

    x = conv_relu(image, params["conv1_w"], params["conv1_b"])
    B, H, W, C = x.shape
    x = x.reshape(B, H // 2, 2, W // 2, 2, C).max(axis=(2, 4))
    x = conv_relu(x, params["conv2_w"], params["conv2_b"])
    x = conv_relu(x, params["conv3_w"], params["conv3_b"])
    emb = x.reshape(B, -1)
    a1 = jnp.tanh(emb @ params["actor1_w"] + params["actor1_b"])
    logits = a1 @ params["actor2_w"] + params["actor2_b"]
    logp = jax.nn.log_softmax(logits, axis=1)
    c1 = jnp.tanh(emb @ params["critic1_w"] + params["critic1_b"])
    value = (c1 @ params["critic2_w"] + params["critic2_b"])[:, 0]
    return logp, value


if __name__ == "__main__":
    key = jax.random.PRNGKey(0)
    k_img, k_par = jax.random.split(key)

    B, H, W = 16, 7, 7          # MiniGrid-style 7x7x3 observation
    n_actions = 7
    image = jax.random.uniform(k_img, (B, H, W, 3), jnp.float32)
    params = make_params(k_par, n_actions)
    weights, config = pack_for_kernel(params, obs_hw=(H, W), n_actions=n_actions)

    fwd = jax.jit(functools.partial(acmodel_forward, config=config))
    logp, value, memory = fwd(weights, image)
    jax.block_until_ready((logp, value, memory))

    ref_logp, ref_value = reference_forward(params, image)
    assert logp.shape == (B, n_actions) and value.shape == (B,)
    assert memory.shape == (B, 0)
    # bf16 MXU operands (f32 accumulation) -> slightly wider tolerance than the
    # all-f32 variant.
    assert jnp.allclose(logp, ref_logp, atol=2e-2, rtol=2e-2)
    assert jnp.allclose(value, ref_value, atol=2e-2, rtol=2e-2)

    # Exercise the padless partial-last-block path (B not a multiple of BB).
    B2 = 13
    logp2, value2, _ = fwd(weights, image[:B2])
    jax.block_until_ready((logp2, value2))
    assert jnp.allclose(logp2, ref_logp[:B2], atol=2e-2, rtol=2e-2)
    assert jnp.allclose(value2, ref_value[:B2], atol=2e-2, rtol=2e-2)

    # TODO(synk): use_memory=True recurrent branches (LSTM/Mamba/Transformer)
    # are not implemented; only the use_memory=False path is covered.
    print("KERNEL_OK")
</pallas_src>

<mosaic_0001>
module attributes {stable_mosaic.version = 11 : i64} {
  func.func @_fused_forward_kernel(%arg0: i32, %arg1: memref<8x147xf32, #tpu.memory_space<vmem>>, %arg2: memref<147x1024xbf16, #tpu.memory_space<vmem>>, %arg3: memref<1x1024xf32, #tpu.memory_space<vmem>>, %arg4: memref<256x128xbf16, #tpu.memory_space<vmem>>, %arg5: memref<1x128xf32, #tpu.memory_space<vmem>>, %arg6: memref<128x64xbf16, #tpu.memory_space<vmem>>, %arg7: memref<1x64xf32, #tpu.memory_space<vmem>>, %arg8: memref<64x128xbf16, #tpu.memory_space<vmem>>, %arg9: memref<1x128xf32, #tpu.memory_space<vmem>>, %arg10: memref<128x128xbf16, #tpu.memory_space<vmem>>, %arg11: memref<1x128xf32, #tpu.memory_space<vmem>>, %arg12: memref<8x128xf32, #tpu.memory_space<vmem>>) attributes {dimension_semantics = [#tpu.dimension_semantics<parallel>], iteration_bounds = array<i64: 2>, scalar_prefetch = 0 : i64, scratch_operands = 0 : i64, tpu.core_type = #tpu.core_type<tc>, window_params = [{transform_indices = @transform_0, window_bounds = array<i64: 8, 147>}, {pipeline_mode = #tpu.pipeline_mode<synchronous>, transform_indices = @transform_1, window_bounds = array<i64: 147, 1024>}, {pipeline_mode = #tpu.pipeline_mode<synchronous>, transform_indices = @transform_2, window_bounds = array<i64: 1, 1024>}, {pipeline_mode = #tpu.pipeline_mode<synchronous>, transform_indices = @transform_3, window_bounds = array<i64: 256, 128>}, {pipeline_mode = #tpu.pipeline_mode<synchronous>, transform_indices = @transform_4, window_bounds = array<i64: 1, 128>}, {pipeline_mode = #tpu.pipeline_mode<synchronous>, transform_indices = @transform_5, window_bounds = array<i64: 128, 64>}, {pipeline_mode = #tpu.pipeline_mode<synchronous>, transform_indices = @transform_6, window_bounds = array<i64: 1, 64>}, {pipeline_mode = #tpu.pipeline_mode<synchronous>, transform_indices = @transform_7, window_bounds = array<i64: 64, 128>}, {pipeline_mode = #tpu.pipeline_mode<synchronous>, transform_indices = @transform_8, window_bounds = array<i64: 1, 128>}, {pipeline_mode = #tpu.pipeline_mode<synchronous>, transform_indices = @transform_9, window_bounds = array<i64: 128, 128>}, {pipeline_mode = #tpu.pipeline_mode<synchronous>, transform_indices = @transform_10, window_bounds = array<i64: 1, 128>}, {transform_indices = @transform_11, window_bounds = array<i64: 8, 128>}]} {
    %c0 = arith.constant 0 : index
    %c0_0 = arith.constant 0 : index
    %0 = vector.load %arg1[%c0, %c0_0] : memref<8x147xf32, #tpu.memory_space<vmem>>, vector<8x147xf32>
    %c0_1 = arith.constant 0 : index
    %c0_2 = arith.constant 0 : index
    %1 = vector.load %arg2[%c0_1, %c0_2] : memref<147x1024xbf16, #tpu.memory_space<vmem>>, vector<147x1024xbf16>
    %2 = arith.truncf %0 : vector<8x147xf32> to vector<8x147xbf16>
    %cst = arith.constant dense<0.000000e+00> : vector<8x1024xf32>
    %3 = tpu.matmul %2, %1, %cst {dimension_numbers = #tpu.dot_dimension_numbers<[1], [0], [0], [1], [0, 0, 1, 1], [], []>} : vector<8x147xbf16>, vector<147x1024xbf16>, vector<8x1024xf32> -> vector<8x1024xf32>
    %c0_3 = arith.constant 0 : index
    %c0_4 = arith.constant 0 : index
    %4 = vector.load %arg3[%c0_3, %c0_4] : memref<1x1024xf32, #tpu.memory_space<vmem>>, vector<1x1024xf32>
    %5 = vector.broadcast %4 : vector<1x1024xf32> to vector<8x1024xf32>
    %6 = arith.addf %3, %5 : vector<8x1024xf32>
    %cst_5 = arith.constant 0.000000e+00 : f32
    %7 = vector.broadcast %cst_5 : f32 to vector<8x1024xf32>
    %8 = arith.maximumf %6, %7 : vector<8x1024xf32>
    %9 = vector.extract_strided_slice %8 {offsets = [0, 0], sizes = [8, 256], strides = [1, 1]} : vector<8x1024xf32> to vector<8x256xf32>
    %10 = vector.extract_strided_slice %8 {offsets = [0, 256], sizes = [8, 256], strides = [1, 1]} : vector<8x1024xf32> to vector<8x256xf32>
    %11 = vector.extract_strided_slice %8 {offsets = [0, 512], sizes = [8, 256], strides = [1, 1]} : vector<8x1024xf32> to vector<8x256xf32>
    %12 = vector.extract_strided_slice %8 {offsets = [0, 768], sizes = [8, 256], strides = [1, 1]} : vector<8x1024xf32> to vector<8x256xf32>
    %13 = arith.maximumf %9, %10 : vector<8x256xf32>
    %14 = arith.maximumf %11, %12 : vector<8x256xf32>
    %15 = arith.maximumf %13, %14 : vector<8x256xf32>
    %c0_6 = arith.constant 0 : index
    %c0_7 = arith.constant 0 : index
    %16 = vector.load %arg4[%c0_6, %c0_7] : memref<256x128xbf16, #tpu.memory_space<vmem>>, vector<256x128xbf16>
    %17 = arith.truncf %15 : vector<8x256xf32> to vector<8x256xbf16>
    %cst_8 = arith.constant dense<0.000000e+00> : vector<8x128xf32>
    %18 = tpu.matmul %17, %16, %cst_8 {dimension_numbers = #tpu.dot_dimension_numbers<[1], [0], [0], [1], [0, 0, 1, 1], [], []>} : vector<8x256xbf16>, vector<256x128xbf16>, vector<8x128xf32> -> vector<8x128xf32>
    %c0_9 = arith.constant 0 : index
    %c0_10 = arith.constant 0 : index
    %19 = vector.load %arg5[%c0_9, %c0_10] : memref<1x128xf32, #tpu.memory_space<vmem>>, vector<1x128xf32>
    %20 = vector.broadcast %19 : vector<1x128xf32> to vector<8x128xf32>
    %21 = arith.addf %18, %20 : vector<8x128xf32>
    %cst_11 = arith.constant 0.000000e+00 : f32
    %22 = vector.broadcast %cst_11 : f32 to vector<8x128xf32>
    %23 = arith.maximumf %21, %22 : vector<8x128xf32>
    %c0_12 = arith.constant 0 : index
    %c0_13 = arith.constant 0 : index
    %24 = vector.load %arg6[%c0_12, %c0_13] : memref<128x64xbf16, #tpu.memory_space<vmem>>, vector<128x64xbf16>
    %25 = arith.truncf %23 : vector<8x128xf32> to vector<8x128xbf16>
    %cst_14 = arith.constant dense<0.000000e+00> : vector<8x64xf32>
    %26 = tpu.matmul %25, %24, %cst_14 {dimension_numbers = #tpu.dot_dimension_numbers<[1], [0], [0], [1], [0, 0, 1, 1], [], []>} : vector<8x128xbf16>, vector<128x64xbf16>, vector<8x64xf32> -> vector<8x64xf32>
    %c0_15 = arith.constant 0 : index
    %c0_16 = arith.constant 0 : index
    %27 = vector.load %arg7[%c0_15, %c0_16] : memref<1x64xf32, #tpu.memory_space<vmem>>, vector<1x64xf32>
    %28 = vector.broadcast %27 : vector<1x64xf32> to vector<8x64xf32>
    %29 = arith.addf %26, %28 : vector<8x64xf32>
    %cst_17 = arith.constant 0.000000e+00 : f32
    %30 = vector.broadcast %cst_17 : f32 to vector<8x64xf32>
    %31 = arith.maximumf %29, %30 : vector<8x64xf32>
    %c0_18 = arith.constant 0 : index
    %c0_19 = arith.constant 0 : index
    %32 = vector.load %arg8[%c0_18, %c0_19] : memref<64x128xbf16, #tpu.memory_space<vmem>>, vector<64x128xbf16>
    %33 = arith.truncf %31 : vector<8x64xf32> to vector<8x64xbf16>
    %cst_20 = arith.constant dense<0.000000e+00> : vector<8x128xf32>
    %34 = tpu.matmul %33, %32, %cst_20 {dimension_numbers = #tpu.dot_dimension_numbers<[1], [0], [0], [1], [0, 0, 1, 1], [], []>} : vector<8x64xbf16>, vector<64x128xbf16>, vector<8x128xf32> -> vector<8x128xf32>
    %c0_21 = arith.constant 0 : index
    %c0_22 = arith.constant 0 : index
    %35 = vector.load %arg9[%c0_21, %c0_22] : memref<1x128xf32, #tpu.memory_space<vmem>>, vector<1x128xf32>
    %36 = vector.broadcast %35 : vector<1x128xf32> to vector<8x128xf32>
    %37 = arith.addf %34, %36 : vector<8x128xf32>
    %38 = math.tanh %37 : vector<8x128xf32>
    %c0_23 = arith.constant 0 : index
    %c0_24 = arith.constant 0 : index
    %39 = vector.load %arg10[%c0_23, %c0_24] : memref<128x128xbf16, #tpu.memory_space<vmem>>, vector<128x128xbf16>
    %40 = arith.truncf %38 : vector<8x128xf32> to vector<8x128xbf16>
    %cst_25 = arith.constant dense<0.000000e+00> : vector<8x128xf32>
    %41 = tpu.matmul %40, %39, %cst_25 {dimension_numbers = #tpu.dot_dimension_numbers<[1], [0], [0], [1], [0, 0, 1, 1], [], []>} : vector<8x128xbf16>, vector<128x128xbf16>, vector<8x128xf32> -> vector<8x128xf32>
    %c0_26 = arith.constant 0 : index
    %c0_27 = arith.constant 0 : index
    %42 = vector.load %arg11[%c0_26, %c0_27] : memref<1x128xf32, #tpu.memory_space<vmem>>, vector<1x128xf32>
    %43 = vector.broadcast %42 : vector<1x128xf32> to vector<8x128xf32>
    %44 = arith.addf %41, %43 : vector<8x128xf32>
    %45 = tpu.iota {dimensions = array<i32: 1>} : vector<8x128xi32>
    %c7_i32 = arith.constant 7 : i32
    %46 = vector.broadcast %c7_i32 : i32 to vector<8x128xi32>
    %47 = arith.cmpi slt, %45, %46 : vector<8x128xi32>
    %cst_28 = arith.constant 0xFF800000 : f32
    %48 = vector.broadcast %cst_28 : f32 to vector<8x128xf32>
    %49 = arith.select %47, %44, %48 : vector<8x128xi1>, vector<8x128xf32>
    %cst_29 = arith.constant dense<0xFF800000> : vector<8xf32>
    %50 = vector.multi_reduction <maximumf>, %49, %cst_29 [1] : vector<8x128xf32> to vector<8xf32>
    %51 = vector.shape_cast %50 : vector<8xf32> to vector<8x1xf32>
    %52 = vector.broadcast %51 : vector<8x1xf32> to vector<8x128xf32>
    %53 = arith.subf %49, %52 : vector<8x128xf32>
    %54 = math.exp %53 : vector<8x128xf32>
    %cst_30 = arith.constant dense<0.000000e+00> : vector<8xf32>
    %55 = vector.multi_reduction <add>, %54, %cst_30 [1] : vector<8x128xf32> to vector<8xf32>
    %56 = vector.shape_cast %55 : vector<8xf32> to vector<8x1xf32>
    %57 = math.log %56 : vector<8x1xf32>
    %58 = arith.addf %57, %51 : vector<8x1xf32>
    %59 = vector.broadcast %58 : vector<8x1xf32> to vector<8x128xf32>
    %60 = arith.subf %44, %59 : vector<8x128xf32>
    %61 = arith.select %47, %60, %44 : vector<8x128xi1>, vector<8x128xf32>
    %c0_31 = arith.constant 0 : index
    %c0_32 = arith.constant 0 : index
    %62 = vector.load %arg12[%c0_31, %c0_32] : memref<8x128xf32, #tpu.memory_space<vmem>>, vector<8x128xf32>
    tpu.vector_store %arg12[%c0_31, %c0_32], %61 {strides = array<i32>} : memref<8x128xf32, #tpu.memory_space<vmem>>, vector<8x128xf32>,
    return
  }
  func.func @transform_0(%arg0: i32) -> (i32, i32) {
    %c0_i32 = arith.constant 0 : i32
    %c0_i32_0 = arith.constant 0 : i32
    return %arg0, %c0_i32 : i32, i32
  }
  func.func @transform_1(%arg0: i32) -> (i32, i32) {
    %c0_i32 = arith.constant 0 : i32
    %c0_i32_0 = arith.constant 0 : i32
    %c0_i32_1 = arith.constant 0 : i32
    return %c0_i32, %c0_i32_0 : i32, i32
  }
  func.func @transform_2(%arg0: i32) -> (i32, i32) {
    %c0_i32 = arith.constant 0 : i32
    %c0_i32_0 = arith.constant 0 : i32
    %c0_i32_1 = arith.constant 0 : i32
    return %c0_i32, %c0_i32_0 : i32, i32
  }
  func.func @transform_3(%arg0: i32) -> (i32, i32) {
    %c0_i32 = arith.constant 0 : i32
    %c0_i32_0 = arith.constant 0 : i32
    %c0_i32_1 = arith.constant 0 : i32
    return %c0_i32, %c0_i32_0 : i32, i32
  }
  func.func @transform_4(%arg0: i32) -> (i32, i32) {
    %c0_i32 = arith.constant 0 : i32
    %c0_i32_0 = arith.constant 0 : i32
    %c0_i32_1 = arith.constant 0 : i32
    return %c0_i32, %c0_i32_0 : i32, i32
  }
  func.func @transform_5(%arg0: i32) -> (i32, i32) {
    %c0_i32 = arith.constant 0 : i32
    %c0_i32_0 = arith.constant 0 : i32
    %c0_i32_1 = arith.constant 0 : i32
    return %c0_i32, %c0_i32_0 : i32, i32
  }
  func.func @transform_6(%arg0: i32) -> (i32, i32) {
    %c0_i32 = arith.constant 0 : i32
    %c0_i32_0 = arith.constant 0 : i32
    %c0_i32_1 = arith.constant 0 : i32
    return %c0_i32, %c0_i32_0 : i32, i32
  }
  func.func @transform_7(%arg0: i32) -> (i32, i32) {
    %c0_i32 = arith.constant 0 : i32
    %c0_i32_0 = arith.constant 0 : i32
    %c0_i32_1 = arith.constant 0 : i32
    return %c0_i32, %c0_i32_0 : i32, i32
  }
  func.func @transform_8(%arg0: i32) -> (i32, i32) {
    %c0_i32 = arith.constant 0 : i32
    %c0_i32_0 = arith.constant 0 : i32
    %c0_i32_1 = arith.constant 0 : i32
    return %c0_i32, %c0_i32_0 : i32, i32
  }
  func.func @transform_9(%arg0: i32) -> (i32, i32) {
    %c0_i32 = arith.constant 0 : i32
    %c0_i32_0 = arith.constant 0 : i32
    %c0_i32_1 = arith.constant 0 : i32
    return %c0_i32, %c0_i32_0 : i32, i32
  }
  func.func @transform_10(%arg0: i32) -> (i32, i32) {
    %c0_i32 = arith.constant 0 : i32
    %c0_i32_0 = arith.constant 0 : i32
    %c0_i32_1 = arith.constant 0 : i32
    return %c0_i32, %c0_i32_0 : i32, i32
  }
  func.func @transform_11(%arg0: i32) -> (i32, i32) {
    %c0_i32 = arith.constant 0 : i32
    %c0_i32_0 = arith.constant 0 : i32
    return %arg0, %c0_i32 : i32, i32
  }
}

</mosaic_0001>

<llo_original>
// kernel: acmodel_forward.1
$region0: #{acmodel_forward.1}
  #allocation0 [shape = 'u32[]', space=smem, size = 0x4, offset = 0x4, fixed_abs, tag = 'smem constant byte address 0x4 - core index']
  #allocation1 [shape = 'u32[144,128]{1,0:T(1,128)}', space=vmem, size = 0x12000, scoped, tag = 'internal scratch']
  %s0 = inlined_call_operand.vmem [shape: f32[16,147], index: 0, kind: input, shape index: {}]
  %s1 = inlined_call_operand.vmem [shape: bf16[147,1024], index: 1, kind: input, shape index: {}]
  %s2 = inlined_call_operand.vmem [shape: f32[1,1024], index: 2, kind: input, shape index: {}]
  %s3 = inlined_call_operand.vmem [shape: bf16[256,128], index: 3, kind: input, shape index: {}]
  %s4 = inlined_call_operand.vmem [shape: f32[1,128], index: 4, kind: input, shape index: {}]
  %s5 = inlined_call_operand.vmem [shape: bf16[128,64], index: 5, kind: input, shape index: {}]
  %s6 = inlined_call_operand.vmem [shape: f32[1,64], index: 6, kind: input, shape index: {}]
  %s7 = inlined_call_operand.vmem [shape: bf16[64,128], index: 7, kind: input, shape index: {}]
  %s8 = inlined_call_operand.vmem [shape: f32[1,128], index: 8, kind: input, shape index: {}]
  %s9 = inlined_call_operand.vmem [shape: bf16[128,128], index: 9, kind: input, shape index: {}]
  %s10 = inlined_call_operand.vmem [shape: f32[1,128], index: 10, kind: input, shape index: {}]
  %s11 = inlined_call_operand.vmem [shape: f32[16,128], index: 11, kind: output, shape index: {}]
  %s12 = sld [smem:[#allocation0]]
  $region77: #{acmodel_forward.1} parent=0
    _
  %s14 = ssub.s32 1, %s12
  %s15 = scalar_select 0, %s14, %s12
  loop: start=0, step=1, limit=4
  $region2: #{acmodel_forward.1} parent=0 // loop_pre_header
    _
  $region3: #{acmodel_forward.1} parent=0 // loop_header
    %s17 = sphi 0, %s21
    %p18 = scmp.ge.s32.totalorder %s17, 4
    %s27 = sphi 0, %s29
    %s30 = sphi 0, %s27
    %s31 = sphi 0, %s30
    %s47 = sphi 0, %s31
    %s51 = sphi 0, %s51
    %s53 = sphi 0, %s51
    %s54 = sphi 0, %s53
    %s68 = sphi 0, %s54
    %s72 = sphi 0, %s72
    %s74 = sphi 0, %s72
    %s75 = sphi 0, %s74
    %s89 = sphi 0, %s75
    %s93 = sphi 0, %s93
    %s95 = sphi 0, %s93
    %s96 = sphi 0, %s95
    %s110 = sphi 0, %s96
    %s114 = sphi 0, %s114
    %s116 = sphi 0, %s114
    %s117 = sphi 0, %s116
    %s131 = sphi 0, %s117
    %s135 = sphi 0, %s135
    %s137 = sphi 0, %s135
    %s138 = sphi 0, %s137
    %s152 = sphi 0, %s138
    %s156 = sphi 0, %s156
    %s158 = sphi 0, %s156
    %s159 = sphi 0, %s158
    %s173 = sphi 0, %s159
    %s177 = sphi 0, %s177
    %s179 = sphi 0, %s177
    %s180 = sphi 0, %s179
    %s194 = sphi 0, %s180
    %s198 = sphi 0, %s198
    %s200 = sphi 0, %s198
    %s201 = sphi 0, %s200
    %s215 = sphi 0, %s201
    %s219 = sphi 0, %s219
    %s221 = sphi 0, %s219
    %s222 = sphi 0, %s221
    %s236 = sphi 0, %s222
    %s240 = sphi 0, %s240
    %s242 = sphi 0, %s240
    %s243 = sphi 0, %s242
    %s257 = sphi 0, %s243
    %s263 = sphi 0, %s265
    %s266 = sphi 0, %s263
    %s267 = sphi 0, %s266
    %s283 = sphi 0, %s267
  $region4: #{acmodel_forward.1} parent=0 // loop_header_branch
    %20 = sbr.rel (%p18) target = $region8
  $region5: #{acmodel_forward.1} parent=0 // loop_body
    %s22 = ssub.s32 %s17, 1
    %s23 = ssub.s32 %s17, 2
    %s24 = sadd.s32 %s17, 1
    %s25 = ssub.s32 %s17, %s24
    %p26 = scmp.eq.s32.totalorder %s25, 0
    %s28 = sadd.s32 %s27, 1
    %s29 = scalar_select %p26, %s27, %s28
    %p32 = pneg %p26
    %p33 = scmp.eq.s32.totalorder %s17, 1
    %p34 = por %p32, %p33
    %p35 = scmp.ne.s32.totalorder %s27, %s30
    %p36 = scmp.eq.s32.totalorder %s17, 0
    %p37 = por %p35, %p36
    %p38 = scmp.ne.s32.totalorder %s27, %s30
    %p39 = scmp.eq.s32.totalorder %s22, 1
    %p40 = por %p38, %p39
    %p41 = scmp.ne.s32.totalorder %s30, %s31
    %p42 = scmp.eq.s32.totalorder %s22, 0
    %p43 = por %p41, %p42
    %p44 = scmp.ne.s32.totalorder %s30, %s31
    %p45 = scmp.eq.s32.totalorder %s23, 1
    %p46 = por %p44, %p45
    %p48 = scmp.ne.s32.totalorder %s31, %s47
    %p49 = scmp.eq.s32.totalorder %s23, 0
    %p50 = por %p48, %p49
    %s52 = sadd.s32 %s51, 1
    %p55 = scmp.eq.s32.totalorder %s17, 1
    %p56 = scmp.ne.s32.totalorder %s51, %s53
    %p57 = scmp.eq.s32.totalorder %s17, 0
    %p58 = por %p56, %p57
    %p59 = scmp.ne.s32.totalorder %s51, %s53
    %p60 = scmp.eq.s32.totalorder %s22, 1
    %p61 = por %p59, %p60
    %p62 = scmp.ne.s32.totalorder %s53, %s54
    %p63 = scmp.eq.s32.totalorder %s22, 0
    %p64 = por %p62, %p63
    %p65 = scmp.ne.s32.totalorder %s53, %s54
    %p66 = scmp.eq.s32.totalorder %s23, 1
    %p67 = por %p65, %p66
    %p69 = scmp.ne.s32.totalorder %s54, %s68
    %p70 = scmp.eq.s32.totalorder %s23, 0
    %p71 = por %p69, %p70
    %s73 = sadd.s32 %s72, 1
    %p76 = scmp.eq.s32.totalorder %s17, 1
    %p77 = scmp.ne.s32.totalorder %s72, %s74
    %p78 = scmp.eq.s32.totalorder %s17, 0
    %p79 = por %p77, %p78
    %p80 = scmp.ne.s32.totalorder %s72, %s74
    %p81 = scmp.eq.s32.totalorder %s22, 1
    %p82 = por %p80, %p81
    %p83 = scmp.ne.s32.totalorder %s74, %s75
    %p84 = scmp.eq.s32.totalorder %s22, 0
    %p85 = por %p83, %p84
    %p86 = scmp.ne.s32.totalorder %s74, %s75
    %p87 = scmp.eq.s32.totalorder %s23, 1
    %p88 = por %p86, %p87
    %p90 = scmp.ne.s32.totalorder %s75, %s89
    %p91 = scmp.eq.s32.totalorder %s23, 0
    %p92 = por %p90, %p91
    %s94 = sadd.s32 %s93, 1
    %p97 = scmp.eq.s32.totalorder %s17, 1
    %p98 = scmp.ne.s32.totalorder %s93, %s95
    %p99 = scmp.eq.s32.totalorder %s17, 0
    %p100 = por %p98, %p99
    %p101 = scmp.ne.s32.totalorder %s93, %s95
    %p102 = scmp.eq.s32.totalorder %s22, 1
    %p103 = por %p101, %p102
    %p104 = scmp.ne.s32.totalorder %s95, %s96
    %p105 = scmp.eq.s32.totalorder %s22, 0
    %p106 = por %p104, %p105
    %p107 = scmp.ne.s32.totalorder %s95, %s96
    %p108 = scmp.eq.s32.totalorder %s23, 1
    %p109 = por %p107, %p108
    %p111 = scmp.ne.s32.totalorder %s96, %s110
    %p112 = scmp.eq.s32.totalorder %s23, 0
    %p113 = por %p111, %p112
    %s115 = sadd.s32 %s114, 1
    %p118 = scmp.eq.s32.totalorder %s17, 1
    %p119 = scmp.ne.s32.totalorder %s114, %s116
    %p120 = scmp.eq.s32.totalorder %s17, 0
    %p121 = por %p119, %p120
    %p122 = scmp.ne.s32.totalorder %s114, %s116
    %p123 = scmp.eq.s32.totalorder %s22, 1
    %p124 = por %p122, %p123
    %p125 = scmp.ne.s32.totalorder %s116, %s117
    %p126 = scmp.eq.s32.totalorder %s22, 0
    %p127 = por %p125, %p126
    %p128 = scmp.ne.s32.totalorder %s116, %s117
    %p129 = scmp.eq.s32.totalorder %s23, 1
    %p130 = por %p128, %p129
    %p132 = scmp.ne.s32.totalorder %s117, %s131
    %p133 = scmp.eq.s32.totalorder %s23, 0
    %p134 = por %p132, %p133
    %s136 = sadd.s32 %s135, 1
    %p139 = scmp.eq.s32.totalorder %s17, 1
    %p140 = scmp.ne.s32.totalorder %s135, %s137
    %p141 = scmp.eq.s32.totalorder %s17, 0
    %p142 = por %p140, %p141
    %p143 = scmp.ne.s32.totalorder %s135, %s137
    %p144 = scmp.eq.s32.totalorder %s22, 1
    %p145 = por %p143, %p144
    %p146 = scmp.ne.s32.totalorder %s137, %s138
    %p147 = scmp.eq.s32.totalorder %s22, 0
    %p148 = por %p146, %p147
    %p149 = scmp.ne.s32.totalorder %s137, %s138
    %p150 = scmp.eq.s32.totalorder %s23, 1
    %p151 = por %p149, %p150
    %p153 = scmp.ne.s32.totalorder %s138, %s152
    %p154 = scmp.eq.s32.totalorder %s23, 0
    %p155 = por %p153, %p154
    %s157 = sadd.s32 %s156, 1
    %p160 = scmp.eq.s32.totalorder %s17, 1
    %p161 = scmp.ne.s32.totalorder %s156, %s158
    %p162 = scmp.eq.s32.totalorder %s17, 0
    %p163 = por %p161, %p162
    %p164 = scmp.ne.s32.totalorder %s156, %s158
    %p165 = scmp.eq.s32.totalorder %s22, 1
    %p166 = por %p164, %p165
    %p167 = scmp.ne.s32.totalorder %s158, %s159
    %p168 = scmp.eq.s32.totalorder %s22, 0
    %p169 = por %p167, %p168
    %p170 = scmp.ne.s32.totalorder %s158, %s159
    %p171 = scmp.eq.s32.totalorder %s23, 1
    %p172 = por %p170, %p171
    %p174 = scmp.ne.s32.totalorder %s159, %s173
    %p175 = scmp.eq.s32.totalorder %s23, 0
    %p176 = por %p174, %p175
    %s178 = sadd.s32 %s177, 1
    %p181 = scmp.eq.s32.totalorder %s17, 1
    %p182 = scmp.ne.s32.totalorder %s177, %s179
    %p183 = scmp.eq.s32.totalorder %s17, 0
    %p184 = por %p182, %p183
    %p185 = scmp.ne.s32.totalorder %s177, %s179
    %p186 = scmp.eq.s32.totalorder %s22, 1
    %p187 = por %p185, %p186
    %p188 = scmp.ne.s32.totalorder %s179, %s180
    %p189 = scmp.eq.s32.totalorder %s22, 0
    %p190 = por %p188, %p189
    %p191 = scmp.ne.s32.totalorder %s179, %s180
    %p192 = scmp.eq.s32.totalorder %s23, 1
    %p193 = por %p191, %p192
    %p195 = scmp.ne.s32.totalorder %s180, %s194
    %p196 = scmp.eq.s32.totalorder %s23, 0
    %p197 = por %p195, %p196
    %s199 = sadd.s32 %s198, 1
    %p202 = scmp.eq.s32.totalorder %s17, 1
    %p203 = scmp.ne.s32.totalorder %s198, %s200
    %p204 = scmp.eq.s32.totalorder %s17, 0
    %p205 = por %p203, %p204
    %p206 = scmp.ne.s32.totalorder %s198, %s200
    %p207 = scmp.eq.s32.totalorder %s22, 1
    %p208 = por %p206, %p207
    %p209 = scmp.ne.s32.totalorder %s200, %s201
    %p210 = scmp.eq.s32.totalorder %s22, 0
    %p211 = por %p209, %p210
    %p212 = scmp.ne.s32.totalorder %s200, %s201
    %p213 = scmp.eq.s32.totalorder %s23, 1
    %p214 = por %p212, %p213
    %p216 = scmp.ne.s32.totalorder %s201, %s215
    %p217 = scmp.eq.s32.totalorder %s23, 0
    %p218 = por %p216, %p217
    %s220 = sadd.s32 %s219, 1
    %p223 = scmp.eq.s32.totalorder %s17, 1
    %p224 = scmp.ne.s32.totalorder %s219, %s221
    %p225 = scmp.eq.s32.totalorder %s17, 0
    %p226 = por %p224, %p225
    %p227 = scmp.ne.s32.totalorder %s219, %s221
    %p228 = scmp.eq.s32.totalorder %s22, 1
    %p229 = por %p227, %p228
    %p230 = scmp.ne.s32.totalorder %s221, %s222
    %p231 = scmp.eq.s32.totalorder %s22, 0
    %p232 = por %p230, %p231
    %p233 = scmp.ne.s32.totalorder %s221, %s222
    %p234 = scmp.eq.s32.totalorder %s23, 1
    %p235 = por %p233, %p234
    %p237 = scmp.ne.s32.totalorder %s222, %s236
    %p238 = scmp.eq.s32.totalorder %s23, 0
    %p239 = por %p237, %p238
    %s241 = sadd.s32 %s240, 1
    %p244 = scmp.eq.s32.totalorder %s17, 1
    %p245 = scmp.ne.s32.totalorder %s240, %s242
    %p246 = scmp.eq.s32.totalorder %s17, 0
    %p247 = por %p245, %p246
    %p248 = scmp.ne.s32.totalorder %s240, %s242
    %p249 = scmp.eq.s32.totalorder %s22, 1
    %p250 = por %p248, %p249
    %p251 = scmp.ne.s32.totalorder %s242, %s243
    %p252 = scmp.eq.s32.totalorder %s22, 0
    %p253 = por %p251, %p252
    %p254 = scmp.ne.s32.totalorder %s242, %s243
    %p255 = scmp.eq.s32.totalorder %s23, 1
    %p256 = por %p254, %p255
    %p258 = scmp.ne.s32.totalorder %s243, %s257
    %p259 = scmp.eq.s32.totalorder %s23, 0
    %p260 = por %p258, %p259
    %s261 = ssub.s32 %s17, %s24
    %p262 = scmp.eq.s32.totalorder %s261, 0
    %s264 = sadd.s32 %s263, 1
    %s265 = scalar_select %p262, %s263, %s264
    %p268 = pneg %p262
    %p269 = scmp.eq.s32.totalorder %s17, 1
    %p270 = por %p268, %p269
    %p271 = scmp.ne.s32.totalorder %s263, %s266
    %p272 = scmp.eq.s32.totalorder %s17, 0
    %p273 = por %p271, %p272
    %p274 = scmp.ne.s32.totalorder %s263, %s266
    %p275 = scmp.eq.s32.totalorder %s22, 1
    %p276 = por %p274, %p275
    %p277 = scmp.ne.s32.totalorder %s266, %s267
    %p278 = scmp.eq.s32.totalorder %s22, 0
    %p279 = por %p277, %p278
    %p280 = scmp.ne.s32.totalorder %s266, %s267
    %p281 = scmp.eq.s32.totalorder %s23, 1
    %p282 = por %p280, %p281
    %p284 = scmp.ne.s32.totalorder %s267, %s283
    %p285 = scmp.eq.s32.totalorder %s23, 0
    %p286 = por %p284, %p285
    %p287 = scmp.le.s32.totalorder 1, %s17
    %p288 = scmp.lt.s32.totalorder %s17, 3
    %p289 = pnand %p287, %p288
    %p290 = pneg %p289
    // Predicated region
    $region9: #{acmodel_forward.1} parent=5 // pred_check
      _
    $region10: #{acmodel_forward.1} parent=5 // pred_check_branch
      %292 = sbr.rel (%p289) target = $region12
    $region11: #{acmodel_forward.1} parent=5 // pred_region
      %s293 = ssub.s32 %s17, 1
      // Predicated region
      $region13: #{acmodel_forward.1} parent=11 // pred_check
        %p294 = pneg %p64
      $region14: #{acmodel_forward.1} parent=11 // pred_check_branch
        %296 = sbr.rel (%p294) target = $region16
      $region15: #{acmodel_forward.1} parent=11 // pred_region
        _
      $region16: #{acmodel_forward.1} parent=11 // pred_fallthru
        _
      // Predicated region
      $region17: #{acmodel_forward.1} parent=11 // pred_check
        %p297 = pneg %p85
      $region18: #{acmodel_forward.1} parent=11 // pred_check_branch
        %299 = sbr.rel (%p297) target = $region20
      $region19: #{acmodel_forward.1} parent=11 // pred_region
        _
      $region20: #{acmodel_forward.1} parent=11 // pred_fallthru
        _
      // Predicated region
      $region21: #{acmodel_forward.1} parent=11 // pred_check
        %p300 = pneg %p106
      $region22: #{acmodel_forward.1} parent=11 // pred_check_branch
        %302 = sbr.rel (%p300) target = $region24
      $region23: #{acmodel_forward.1} parent=11 // pred_region
        _
      $region24: #{acmodel_forward.1} parent=11 // pred_fallthru
        _
      // Predicated region
      $region25: #{acmodel_forward.1} parent=11 // pred_check
        %p303 = pneg %p127
      $region26: #{acmodel_forward.1} parent=11 // pred_check_branch
        %305 = sbr.rel (%p303) target = $region28
      $region27: #{acmodel_forward.1} parent=11 // pred_region
        _
      $region28: #{acmodel_forward.1} parent=11 // pred_fallthru
        _
      // Predicated region
      $region29: #{acmodel_forward.1} parent=11 // pred_check
        %p306 = pneg %p148
      $region30: #{acmodel_forward.1} parent=11 // pred_check_branch
        %308 = sbr.rel (%p306) target = $region32
      $region31: #{acmodel_forward.1} parent=11 // pred_region
        _
      $region32: #{acmodel_forward.1} parent=11 // pred_fallthru
        _
      // Predicated region
      $region33: #{acmodel_forward.1} parent=11 // pred_check
        %p309 = pneg %p169
      $region34: #{acmodel_forward.1} parent=11 // pred_check_branch
        %311 = sbr.rel (%p309) target = $region36
      $region35: #{acmodel_forward.1} parent=11 // pred_region
        _
      $region36: #{acmodel_forward.1} parent=11 // pred_fallthru
        _
      // Predicated region
      $region37: #{acmodel_forward.1} parent=11 // pred_check
        %p312 = pneg %p190
      $region38: #{acmodel_forward.1} parent=11 // pred_check_branch
        %314 = sbr.rel (%p312) target = $region40
      $region39: #{acmodel_forward.1} parent=11 // pred_region
        _
      $region40: #{acmodel_forward.1} parent=11 // pred_fallthru
        _
      // Predicated region
      $region41: #{acmodel_forward.1} parent=11 // pred_check
        %p315 = pneg %p211
      $region42: #{acmodel_forward.1} parent=11 // pred_check_branch
        %317 = sbr.rel (%p315) target = $region44
      $region43: #{acmodel_forward.1} parent=11 // pred_region
        _
      $region44: #{acmodel_forward.1} parent=11 // pred_fallthru
        _
      // Predicated region
      $region45: #{acmodel_forward.1} parent=11 // pred_check
        %p318 = pneg %p232
      $region46: #{acmodel_forward.1} parent=11 // pred_check_branch
        %320 = sbr.rel (%p318) target = $region48
      $region47: #{acmodel_forward.1} parent=11 // pred_region
        _
      $region48: #{acmodel_forward.1} parent=11 // pred_fallthru
        _
      // Predicated region
      $region49: #{acmodel_forward.1} parent=11 // pred_check
        %p321 = pneg %p253
      $region50: #{acmodel_forward.1} parent=11 // pred_check_branch
        %323 = sbr.rel (%p321) target = $region52
      $region51: #{acmodel_forward.1} parent=11 // pred_region
        _
      $region52: #{acmodel_forward.1} parent=11 // pred_fallthru
        _
    $region12: #{acmodel_forward.1} parent=5 // pred_fallthru
      _
    %p324 = scmp.lt.s32.totalorder %s17, 2
    // Predicated region
    $region53: #{acmodel_forward.1} parent=5 // pred_check
      %p325 = pneg %p324
    $region54: #{acmodel_forward.1} parent=5 // pred_check_branch
      %327 = sbr.rel (%p325) target = $region56
    $region55: #{acmodel_forward.1} parent=5 // pred_region
      // Predicated region
      $region57: #{acmodel_forward.1} parent=55 // pred_check
        %p328 = pneg %p37
      $region58: #{acmodel_forward.1} parent=55 // pred_check_branch
        %330 = sbr.rel (%p328) target = $region60
      $region59: #{acmodel_forward.1} parent=55 // pred_region
        %p331 = scmp.lt.s32.totalorder %s17, 1
        %s332 = scalar_select %p331, %s17, 1
        %s333 = smul.addr %s332, 2
        %s334 = smul.addr %s333, 8
        %s335 = scalar_lea.vmem %s0, %s334
      $region60: #{acmodel_forward.1} parent=55 // pred_fallthru
        _
    $region56: #{acmodel_forward.1} parent=5 // pred_fallthru
      _
    %p336 = scmp.le.s32.totalorder 1, %s17
    %p337 = scmp.lt.s32.totalorder %s17, 3
    %p338 = pnand %p336, %p337
    %p339 = pneg %p338
    // Predicated region
    $region61: #{acmodel_forward.1} parent=5 // pred_check
      _
    $region62: #{acmodel_forward.1} parent=5 // pred_check_branch
      %341 = sbr.rel (%p338) target = $region64
    $region63: #{acmodel_forward.1} parent=5 // pred_region
      %s342 = ssub.s32 %s17, 1
      %p343 = scmp.lt.s32.totalorder %s22, 1
      %s344 = scalar_select %p343, %s22, 1
      %s345 = smul.addr %s344, 2
      %s346 = smul.addr %s345, 8
      %s347 = scalar_lea.vmem %s0, %s346
      %p348 = pneg %p43
      %p349 = pneg %p40
      %p350 = pneg %p64
      %p351 = pneg %p61
      %p352 = pneg %p85
      %p353 = pneg %p82
      %p354 = pneg %p106
      %p355 = pneg %p103
      %p356 = pneg %p127
      %p357 = pneg %p124
      %p358 = pneg %p148
      %p359 = pneg %p145
      %p360 = pneg %p169
      %p361 = pneg %p166
      %p362 = pneg %p190
      %p363 = pneg %p187
      %p364 = pneg %p211
      %p365 = pneg %p208
      %p366 = pneg %p232
      %p367 = pneg %p229
      %p368 = pneg %p253
      %p369 = pneg %p250
      %p370 = pneg %p279
      %p371 = pneg %p276
      %p372 = scmp.lt.s32.totalorder %s22, 1
      %s373 = scalar_select %p372, %s22, 1
      %s374 = smul.addr %s373, 8
      %s375 = scalar_lea.vmem %s11, %s374
      %p376 = scmp.lt.s32.totalorder %s22, 1
      %s377 = scalar_select %p376, %s22, 1
      %s378 = smul.addr %s377, 2
      %s379 = smul.addr %s378, 8
      %s380 = scalar_lea.vmem %s0, %s379
      %p381 = scmp.lt.s32.totalorder %s22, 1
      %s382 = scalar_select %p381, %s22, 1
      %s383 = smul.addr %s382, 8
      %s384 = scalar_lea.vmem %s11, %s383
      %v386 = vld [vmem:[%s380] sm:$0xff]
      %v387 = vld [vmem:[%s380 + $0x8] sm:$0xff]
      %v388 = vld [vmem:[%s1] sm:$0xff]
      %v389 = vld [vmem:[%s1 + $0x8] sm:$0xff]
      %v390 = vld [vmem:[%s1 + $0x10] sm:$0xff]
      %v391 = vld [vmem:[%s1 + $0x18] sm:$0xff]
      %v392 = vld [vmem:[%s1 + $0x20] sm:$0xff]
      %v393 = vld [vmem:[%s1 + $0x28] sm:$0xff]
      %v394 = vld [vmem:[%s1 + $0x30] sm:$0xff]
      %v395 = vld [vmem:[%s1 + $0x38] sm:$0xff]
      %v396 = vld [vmem:[%s1 + $0x40] sm:$0xff]
      %v397 = vld [vmem:[%s1 + $0x48] sm:$0xff]
      %v398 = vld [vmem:[%s1 + $0x50] sm:$0xff]
      %v399 = vld [vmem:[%s1 + $0x58] sm:$0xff]
      %v400 = vld [vmem:[%s1 + $0x60] sm:$0xff]
      %v401 = vld [vmem:[%s1 + $0x68] sm:$0xff]
      %v402 = vld [vmem:[%s1 + $0x70] sm:$0xff]
      %v403 = vld [vmem:[%s1 + $0x78] sm:$0xff]
      %v404 = vld [vmem:[%s1 + $0x80] sm:$0xff]
      %v405 = vld [vmem:[%s1 + $0x88] sm:$0xff]
      %v406 = vld [vmem:[%s1 + $0x90] sm:$0xff]
      %v407 = vld [vmem:[%s1 + $0x98] sm:$0xff]
      %v408 = vld [vmem:[%s1 + $0xa0] sm:$0xff]
      %v409 = vld [vmem:[%s1 + $0xa8] sm:$0xff]
      %v410 = vld [vmem:[%s1 + $0xb0] sm:$0xff]
      %v411 = vld [vmem:[%s1 + $0xb8] sm:$0xff]
      %v412 = vld [vmem:[%s1 + $0xc0] sm:$0xff]
      %v413 = vld [vmem:[%s1 + $0xc8] sm:$0xff]
      %v414 = vld [vmem:[%s1 + $0xd0] sm:$0xff]
      %v415 = vld [vmem:[%s1 + $0xd8] sm:$0xff]
      %v416 = vld [vmem:[%s1 + $0xe0] sm:$0xff]
      %v417 = vld [vmem:[%s1 + $0xe8] sm:$0xff]
      %v418 = vld [vmem:[%s1 + $0xf0] sm:$0xff]
      %v419 = vld [vmem:[%s1 + $0xf8] sm:$0xff]
      %v420 = vld [vmem:[%s1 + $0x100] sm:$0xff]
      %v421 = vld [vmem:[%s1 + $0x108] sm:$0xff]
      %v422 = vld [vmem:[%s1 + $0x110] sm:$0xff]
      %v423 = vld [vmem:[%s1 + $0x118] sm:$0xff]
      %v424 = vld [vmem:[%s1 + $0x120] sm:$0xff]
      %v425 = vld [vmem:[%s1 + $0x128] sm:$0xff]
      %v426 = vld [vmem:[%s1 + $0x130] sm:$0xff]
      %v427 = vld [vmem:[%s1 + $0x138] sm:$0xff]
      %v428 = vld [vmem:[%s1 + $0x140] sm:$0xff]
      %v429 = vld [vmem:[%s1 + $0x148] sm:$0xff]
      %v430 = vld [vmem:[%s1 + $0x150] sm:$0xff]
      %v431 = vld [vmem:[%s1 + $0x158] sm:$0xff]
      %v432 = vld [vmem:[%s1 + $0x160] sm:$0xff]
      %v433 = vld [vmem:[%s1 + $0x168] sm:$0xff]
      %v434 = vld [vmem:[%s1 + $0x170] sm:$0xff]
      %v435 = vld [vmem:[%s1 + $0x178] sm:$0xff]
      %v436 = vld [vmem:[%s1 + $0x180] sm:$0xff]
      %v437 = vld [vmem:[%s1 + $0x188] sm:$0xff]
      %v438 = vld [vmem:[%s1 + $0x190] sm:$0xff]
      %v439 = vld [vmem:[%s1 + $0x198] sm:$0xff]
      %v440 = vld [vmem:[%s1 + $0x1a0] sm:$0xff]
      %v441 = vld [vmem:[%s1 + $0x1a8] sm:$0xff]
      %v442 = vld [vmem:[%s1 + $0x1b0] sm:$0xff]
      %v443 = vld [vmem:[%s1 + $0x1b8] sm:$0xff]
      %v444 = vld [vmem:[%s1 + $0x1c0] sm:$0xff]
      %v445 = vld [vmem:[%s1 + $0x1c8] sm:$0xff]
      %v446 = vld [vmem:[%s1 + $0x1d0] sm:$0xff]
      %v447 = vld [vmem:[%s1 + $0x1d8] sm:$0xff]
      %v448 = vld [vmem:[%s1 + $0x1e0] sm:$0xff]
      %v449 = vld [vmem:[%s1 + $0x1e8] sm:$0xff]
      %v450 = vld [vmem:[%s1 + $0x1f0] sm:$0xff]
      %v451 = vld [vmem:[%s1 + $0x1f8] sm:$0xff]
      %v452 = vld [vmem:[%s1 + $0x200] sm:$0xff]
      %v453 = vld [vmem:[%s1 + $0x208] sm:$0xff]
      %v454 = vld [vmem:[%s1 + $0x210] sm:$0xff]
      %v455 = vld [vmem:[%s1 + $0x218] sm:$0xff]
      %v456 = vld [vmem:[%s1 + $0x220] sm:$0xff]
      %v457 = vld [vmem:[%s1 + $0x228] sm:$0xff]
      %v458 = vld [vmem:[%s1 + $0x230] sm:$0xff]
      %v459 = vld [vmem:[%s1 + $0x238] sm:$0xff]
      %v460 = vld [vmem:[%s1 + $0x240] sm:$0x33]
      %v461 = vld [vmem:[%s1 + $0x248] sm:$0x33]
      %v462 = vld [vmem:[%s1 + $0x250] sm:$0x33]
      %v463 = vld [vmem:[%s1 + $0x258] sm:$0x33]
      %v464 = vpack.c.bf16 %v386, %v386
      %v465 = vpack.c.bf16 %v387, %v387
      %v466 = vld [vmem:[%s2] sm:$0xff]
      %v468 = vlaneseq
      %v469 = vshrl.u32 %v468, 7
      %v470 = vsub.s32 0, %v469
      %v471 = vrot.slane %v466, %v470
      %v472 = vlaneseq
      %v473 = vshrl.u32 %v472, 7
      %v474 = vsub.s32 1, %v473
      %v475 = vrot.slane %v466, %v474
      %v476 = vlaneseq
      %v477 = vshrl.u32 %v476, 7
      %v478 = vsub.s32 2, %v477
      %v479 = vrot.slane %v466, %v478
      %v480 = vlaneseq
      %v481 = vshrl.u32 %v480, 7
      %v482 = vsub.s32 3, %v481
      %v483 = vrot.slane %v466, %v482
      %v484 = vlaneseq
      %v485 = vshrl.u32 %v484, 7
      %v486 = vsub.s32 4, %v485
      %v487 = vrot.slane %v466, %v486
      %v488 = vlaneseq
      %v489 = vshrl.u32 %v488, 7
      %v490 = vsub.s32 5, %v489
      %v491 = vrot.slane %v466, %v490
      %v492 = vlaneseq
      %v493 = vshrl.u32 %v492, 7
      %v494 = vsub.s32 6, %v493
      %v495 = vrot.slane %v466, %v494
      %v496 = vlaneseq
      %v497 = vshrl.u32 %v496, 7
      %v498 = vsub.s32 7, %v497
      %v499 = vrot.slane %v466, %v498
      %v584 = vunpack.c.l.b16 %v388
      %v585 = vunpack.c.h.b16 %v388
      %v586 = vunpack.c.l.b16 %v389
      %v587 = vunpack.c.h.b16 %v389
      %v588 = vunpack.c.l.b16 %v390
      %v589 = vunpack.c.h.b16 %v390
      %v590 = vunpack.c.l.b16 %v391
      %v591 = vunpack.c.h.b16 %v391
      %v592 = vunpack.c.l.b16 %v392
      %v593 = vunpack.c.h.b16 %v392
      %v594 = vunpack.c.l.b16 %v393
      %v595 = vunpack.c.h.b16 %v393
      %v596 = vunpack.c.l.b16 %v394
      %v597 = vunpack.c.h.b16 %v394
      %v598 = vunpack.c.l.b16 %v395
      %v599 = vunpack.c.h.b16 %v395
      %v600 = vunpack.c.l.b16 %v396
      %v601 = vunpack.c.h.b16 %v396
      %v602 = vunpack.c.l.b16 %v397
      %v603 = vunpack.c.h.b16 %v397
      %v604 = vunpack.c.l.b16 %v398
      %v605 = vunpack.c.h.b16 %v398
      %v606 = vunpack.c.l.b16 %v399
      %v607 = vunpack.c.h.b16 %v399
      %v608 = vunpack.c.l.b16 %v400
      %v609 = vunpack.c.h.b16 %v400
      %v610 = vunpack.c.l.b16 %v401
      %v611 = vunpack.c.h.b16 %v401
      %v612 = vunpack.c.l.b16 %v402
      %v613 = vunpack.c.h.b16 %v402
      %v614 = vunpack.c.l.b16 %v403
      %v615 = vunpack.c.h.b16 %v403
      %v616 = vunpack.c.l.b16 %v404
      %v617 = vunpack.c.h.b16 %v404
      %v618 = vunpack.c.l.b16 %v405
      %v619 = vunpack.c.h.b16 %v405
      %v620 = vunpack.c.l.b16 %v406
      %v621 = vunpack.c.h.b16 %v406
      %v622 = vunpack.c.l.b16 %v407
      %v623 = vunpack.c.h.b16 %v407
      %v624 = vunpack.c.l.b16 %v408
      %v625 = vunpack.c.h.b16 %v408
      %v626 = vunpack.c.l.b16 %v409
      %v627 = vunpack.c.h.b16 %v409
      %v628 = vunpack.c.l.b16 %v410
      %v629 = vunpack.c.h.b16 %v410
      %v630 = vunpack.c.l.b16 %v411
      %v631 = vunpack.c.h.b16 %v411
      %v632 = vunpack.c.l.b16 %v412
      %v633 = vunpack.c.h.b16 %v412
      %v634 = vunpack.c.l.b16 %v413
      %v635 = vunpack.c.h.b16 %v413
      %v636 = vunpack.c.l.b16 %v414
      %v637 = vunpack.c.h.b16 %v414
      %v638 = vunpack.c.l.b16 %v415
      %v639 = vunpack.c.h.b16 %v415
      %v640 = vunpack.c.l.b16 %v416
      %v641 = vunpack.c.h.b16 %v416
      %v642 = vunpack.c.l.b16 %v417
      %v643 = vunpack.c.h.b16 %v417
      %v644 = vunpack.c.l.b16 %v418
      %v645 = vunpack.c.h.b16 %v418
      %v646 = vunpack.c.l.b16 %v419
      %v647 = vunpack.c.h.b16 %v419
      %v648 = vunpack.c.l.b16 %v420
      %v649 = vunpack.c.h.b16 %v420
      %v650 = vunpack.c.l.b16 %v421
      %v651 = vunpack.c.h.b16 %v421
      %v652 = vunpack.c.l.b16 %v422
      %v653 = vunpack.c.h.b16 %v422
      %v654 = vunpack.c.l.b16 %v423
      %v655 = vunpack.c.h.b16 %v423
      %v656 = vunpack.c.l.b16 %v424
      %v657 = vunpack.c.h.b16 %v424
      %v658 = vunpack.c.l.b16 %v425
      %v659 = vunpack.c.h.b16 %v425
      %v660 = vunpack.c.l.b16 %v426
      %v661 = vunpack.c.h.b16 %v426
      %v662 = vunpack.c.l.b16 %v427
      %v663 = vunpack.c.h.b16 %v427
      %v664 = vunpack.c.l.b16 %v428
      %v665 = vunpack.c.h.b16 %v428
      %v666 = vunpack.c.l.b16 %v429
      %v667 = vunpack.c.h.b16 %v429
      %v668 = vunpack.c.l.b16 %v430
      %v669 = vunpack.c.h.b16 %v430
      %v670 = vunpack.c.l.b16 %v431
      %v671 = vunpack.c.h.b16 %v431
      %v672 = vunpack.c.l.b16 %v432
      %v673 = vunpack.c.h.b16 %v432
      %v674 = vunpack.c.l.b16 %v433
      %v675 = vunpack.c.h.b16 %v433
      %v676 = vunpack.c.l.b16 %v434
      %v677 = vunpack.c.h.b16 %v434
      %v678 = vunpack.c.l.b16 %v435
      %v679 = vunpack.c.h.b16 %v435
      %v680 = vunpack.c.l.b16 %v436
      %v681 = vunpack.c.h.b16 %v436
      %v682 = vunpack.c.l.b16 %v437
      %v683 = vunpack.c.h.b16 %v437
      %v684 = vunpack.c.l.b16 %v438
      %v685 = vunpack.c.h.b16 %v438
      %v686 = vunpack.c.l.b16 %v439
      %v687 = vunpack.c.h.b16 %v439
      %v688 = vunpack.c.l.b16 %v440
      %v689 = vunpack.c.h.b16 %v440
      %v690 = vunpack.c.l.b16 %v441
      %v691 = vunpack.c.h.b16 %v441
      %v692 = vunpack.c.l.b16 %v442
      %v693 = vunpack.c.h.b16 %v442
      %v694 = vunpack.c.l.b16 %v443
      %v695 = vunpack.c.h.b16 %v443
      %v696 = vunpack.c.l.b16 %v444
      %v697 = vunpack.c.h.b16 %v444
      %v698 = vunpack.c.l.b16 %v445
      %v699 = vunpack.c.h.b16 %v445
      %v700 = vunpack.c.l.b16 %v446
      %v701 = vunpack.c.h.b16 %v446
      %v702 = vunpack.c.l.b16 %v447
      %v703 = vunpack.c.h.b16 %v447
      %v704 = vunpack.c.l.b16 %v448
      %v705 = vunpack.c.h.b16 %v448
      %v706 = vunpack.c.l.b16 %v449
      %v707 = vunpack.c.h.b16 %v449
      %v708 = vunpack.c.l.b16 %v450
      %v709 = vunpack.c.h.b16 %v450
      %v710 = vunpack.c.l.b16 %v451
      %v711 = vunpack.c.h.b16 %v451
      %v712 = vunpack.c.l.b16 %v452
      %v713 = vunpack.c.h.b16 %v452
      %v714 = vunpack.c.l.b16 %v453
      %v715 = vunpack.c.h.b16 %v453
      %v716 = vunpack.c.l.b16 %v454
      %v717 = vunpack.c.h.b16 %v454
      %v718 = vunpack.c.l.b16 %v455
      %v719 = vunpack.c.h.b16 %v455
      %v720 = vunpack.c.l.b16 %v456
      %v721 = vunpack.c.h.b16 %v456
      %v722 = vunpack.c.l.b16 %v457
      %v723 = vunpack.c.h.b16 %v457
      %v724 = vunpack.c.l.b16 %v458
      %v725 = vunpack.c.h.b16 %v458
      %v726 = vunpack.c.l.b16 %v459
      %v727 = vunpack.c.h.b16 %v459
      %v728 = vunpack.c.l.b16 %v460
      %v729 = vunpack.c.h.b16 %v460
      %v730 = vunpack.c.l.b16 %v461
      %v731 = vunpack.c.h.b16 %v461
      %v732 = vunpack.c.l.b16 %v462
      %v733 = vunpack.c.h.b16 %v462
      %v734 = vunpack.c.l.b16 %v463
      %v735 = vunpack.c.h.b16 %v463
      %v736 = vpack.c.b16 %v592, %v584
      %v737 = vpack.c.b16 %v593, %v585
      %v738 = vpack.c.b16 %v594, %v586
      %v739 = vpack.c.b16 %v595, %v587
      %v740 = vpack.c.b16 %v596, %v588
      %v741 = vpack.c.b16 %v597, %v589
      %v742 = vpack.c.b16 %v598, %v590
      %v743 = vpack.c.b16 %v599, %v591
      %v744 = vpack.c.b16 %v608, %v600
      %v745 = vpack.c.b16 %v609, %v601
      %v746 = vpack.c.b16 %v610, %v602
      %v747 = vpack.c.b16 %v611, %v603
      %v748 = vpack.c.b16 %v612, %v604
      %v749 = vpack.c.b16 %v613, %v605
      %v750 = vpack.c.b16 %v614, %v606
      %v751 = vpack.c.b16 %v615, %v607
      %v752 = vpack.c.b16 %v624, %v616
      %v753 = vpack.c.b16 %v625, %v617
      %v754 = vpack.c.b16 %v626, %v618
      %v755 = vpack.c.b16 %v627, %v619
      %v756 = vpack.c.b16 %v628, %v620
      %v757 = vpack.c.b16 %v629, %v621
      %v758 = vpack.c.b16 %v630, %v622
      %v759 = vpack.c.b16 %v631, %v623
      %v760 = vpack.c.b16 %v640, %v632
      %v761 = vpack.c.b16 %v641, %v633
      %v762 = vpack.c.b16 %v642, %v634
      %v763 = vpack.c.b16 %v643, %v635
      %v764 = vpack.c.b16 %v644, %v636
      %v765 = vpack.c.b16 %v645, %v637
      %v766 = vpack.c.b16 %v646, %v638
      %v767 = vpack.c.b16 %v647, %v639
      %v768 = vpack.c.b16 %v656, %v648
      %v769 = vpack.c.b16 %v657, %v649
      %v770 = vpack.c.b16 %v658, %v650
      %v771 = vpack.c.b16 %v659, %v651
      %v772 = vpack.c.b16 %v660, %v652
      %v773 = vpack.c.b16 %v661, %v653
      %v774 = vpack.c.b16 %v662, %v654
      %v775 = vpack.c.b16 %v663, %v655
      %v776 = vpack.c.b16 %v672, %v664
      %v777 = vpack.c.b16 %v673, %v665
      %v778 = vpack.c.b16 %v674, %v666
      %v779 = vpack.c.b16 %v675, %v667
      %v780 = vpack.c.b16 %v676, %v668
      %v781 = vpack.c.b16 %v677, %v669
      %v782 = vpack.c.b16 %v678, %v670
      %v783 = vpack.c.b16 %v679, %v671
      %v784 = vpack.c.b16 %v688, %v680
      %v785 = vpack.c.b16 %v689, %v681
      %v786 = vpack.c.b16 %v690, %v682
      %v787 = vpack.c.b16 %v691, %v683
      %v788 = vpack.c.b16 %v692, %v684
      %v789 = vpack.c.b16 %v693, %v685
      %v790 = vpack.c.b16 %v694, %v686
      %v791 = vpack.c.b16 %v695, %v687
      %v792 = vpack.c.b16 %v704, %v696
      %v793 = vpack.c.b16 %v705, %v697
      %v794 = vpack.c.b16 %v706, %v698
      %v795 = vpack.c.b16 %v707, %v699
      %v796 = vpack.c.b16 %v708, %v700
      %v797 = vpack.c.b16 %v709, %v701
      %v798 = vpack.c.b16 %v710, %v702
      %v799 = vpack.c.b16 %v711, %v703
      %v800 = vpack.c.b16 %v720, %v712
      %v801 = vpack.c.b16 %v721, %v713
      %v802 = vpack.c.b16 %v722, %v714
      %v803 = vpack.c.b16 %v723, %v715
      %v804 = vpack.c.b16 %v724, %v716
      %v805 = vpack.c.b16 %v725, %v717
      %v806 = vpack.c.b16 %v726, %v718
      %v807 = vpack.c.b16 %v727, %v719
      %v808 = vpack.c.b16 %v728, %v728
      %v809 = vpack.c.b16 %v729, %v729
      %v810 = vpack.c.b16 %v730, %v730
      %v811 = vpack.c.b16 %v731, %v731
      %v812 = vpack.c.b16 %v732, %v732
      %v813 = vpack.c.b16 %v733, %v733
      %v814 = vpack.c.b16 %v734, %v734
      %v815 = vpack.c.b16 %v735, %v735
      %vm888 = vcmask 154624
      %v890 = vsel %vm888, %v465, 0
      %vm892 = vcmask 1040384
      %vm893 = vcmask 1041408
      %v894 = vsel %vm892, 4294967295, 65535
      %v895 = vsel %vm893, %v894, 0
      %v897 = vand.u32 %v808, %v895
      %v900 = vand.u32 %v809, %v895
      %v903 = vand.u32 %v810, %v895
      %v906 = vand.u32 %v811, %v895
      %v909 = vand.u32 %v812, %v895
      %v912 = vand.u32 %v813, %v895
      %v915 = vand.u32 %v814, %v895
      %v918 = vand.u32 %v815, %v895
      %920 = vmatprep.subr.bf16.mxu0 %v737
      %921 = vmatpush1.bf16.msra.mxu0 %v736
      %922 = vmatprep.subr.bf16.mxu0 %v745
      %923 = vmatpush1.bf16.msra.mxu0 %v744
      %924 = vmatprep.subr.bf16.mxu0 %v753
      %925 = vmatpush1.bf16.msra.mxu0 %v752
      %926 = vmatprep.subr.bf16.mxu0 %v761
      %927 = vmatpush1.bf16.msra.mxu0 %v760
      %928 = vmatprep.subr.bf16.mxu0 %v769
      %929 = vmatpush1.bf16.msra.mxu0 %v768
      %930 = vmatprep.subr.bf16.mxu0 %v777
      %931 = vmatpush1.bf16.msra.mxu0 %v776
      %932 = vmatprep.subr.bf16.mxu0 %v785
      %933 = vmatpush1.bf16.msra.mxu0 %v784
      %934 = vmatprep.subr.bf16.mxu0 %v793
      %935 = vmatpush1.bf16.msra.mxu0 %v792
      %936 = vmatprep.subr.bf16.mxu0 %v801
      %937 = vmatpush1.bf16.msra.mxu0 %v800
      %938 = vmatprep.subr.bf16.mxu0 %v900
      %939 = vmatpush1.bf16.msra.mxu0 %v897
      %940 = vmatprep.subr.bf16.mxu0 0
      %941 = vmatpush1.bf16.msra.mxu0 0
      %942 = vmatprep.subr.bf16.mxu0 0
      %943 = vmatpush1.bf16.msra.mxu0 0
      %944 = vmatprep.subr.bf16.mxu0 0
      %945 = vmatpush1.bf16.msra.mxu0 0
      %946 = vmatprep.subr.bf16.mxu0 0
      %947 = vmatpush1.bf16.msra.mxu0 0
      %948 = vmatprep.subr.bf16.mxu0 0
      %949 = vmatpush1.bf16.msra.mxu0 0
      %950 = vmatprep.subr.bf16.mxu0 0
      %951 = vmatpush1.bf16.msra.mxu0 0
      %952 = vmatprep.mubr.bf16.mxu0 %v890
      %953 = vmatmul.mubr.bf16.gmra.mrb[0].mxu0 %v464
      %v954 = vpop.f32.mrb[0].mxu0
      %v955 = vadd.f32 %v471, %v954
      %v956 = vpop.f32.mrb[0].mxu0
      %v957 = vadd.f32 %v475, %v956
      %v958 = vpop.f32.mrb[0].mxu0
      %v959 = vpop.f32.mrb[0].mxu0
      %960 = vdwg.mxu0
      %961 = vmatprep.subr.bf16.mxu0 %v739
      %962 = vmatpush1.bf16.msra.mxu0 %v738
      %963 = vmatprep.subr.bf16.mxu0 %v747
      %964 = vmatpush1.bf16.msra.mxu0 %v746
      %965 = vmatprep.subr.bf16.mxu0 %v755
      %966 = vmatpush1.bf16.msra.mxu0 %v754
      %967 = vmatprep.subr.bf16.mxu0 %v763
      %968 = vmatpush1.bf16.msra.mxu0 %v762
      %969 = vmatprep.subr.bf16.mxu0 %v771
      %970 = vmatpush1.bf16.msra.mxu0 %v770
      %971 = vmatprep.subr.bf16.mxu0 %v779
      %972 = vmatpush1.bf16.msra.mxu0 %v778
      %973 = vmatprep.subr.bf16.mxu0 %v787
      %974 = vmatpush1.bf16.msra.mxu0 %v786
      %975 = vmatprep.subr.bf16.mxu0 %v795
      %976 = vmatpush1.bf16.msra.mxu0 %v794
      %977 = vmatprep.subr.bf16.mxu0 %v803
      %978 = vmatpush1.bf16.msra.mxu0 %v802
      %979 = vmatprep.subr.bf16.mxu0 %v906
      %980 = vmatpush1.bf16.msra.mxu0 %v903
      %981 = vmatprep.subr.bf16.mxu0 0
      %982 = vmatpush1.bf16.msra.mxu0 0
      %983 = vmatprep.subr.bf16.mxu0 0
      %984 = vmatpush1.bf16.msra.mxu0 0
      %985 = vmatprep.subr.bf16.mxu0 0
      %986 = vmatpush1.bf16.msra.mxu0 0
      %987 = vmatprep.subr.bf16.mxu0 0
      %988 = vmatpush1.bf16.msra.mxu0 0
      %989 = vmatprep.subr.bf16.mxu0 0
      %990 = vmatpush1.bf16.msra.mxu0 0
      %991 = vmatprep.subr.bf16.mxu0 0
      %992 = vmatpush1.bf16.msra.mxu0 0
      %993 = vmatprep.mubr.bf16.mxu0 %v890
      %994 = vmatmul.mubr.bf16.gmra.mrb[0].mxu0 %v464
      %v995 = vpop.f32.mrb[0].mxu0
      %v996 = vadd.f32 %v479, %v995
      %v997 = vpop.f32.mrb[0].mxu0
      %v998 = vadd.f32 %v483, %v997
      %v999 = vpop.f32.mrb[0].mxu0
      %v1000 = vpop.f32.mrb[0].mxu0
      %1001 = vdwg.mxu0
      %1002 = vmatprep.subr.bf16.mxu0 %v741
      %1003 = vmatpush1.bf16.msra.mxu0 %v740
      %1004 = vmatprep.subr.bf16.mxu0 %v749
      %1005 = vmatpush1.bf16.msra.mxu0 %v748
      %1006 = vmatprep.subr.bf16.mxu0 %v757
      %1007 = vmatpush1.bf16.msra.mxu0 %v756
      %1008 = vmatprep.subr.bf16.mxu0 %v765
      %1009 = vmatpush1.bf16.msra.mxu0 %v764
      %1010 = vmatprep.subr.bf16.mxu0 %v773
      %1011 = vmatpush1.bf16.msra.mxu0 %v772
      %1012 = vmatprep.subr.bf16.mxu0 %v781
      %1013 = vmatpush1.bf16.msra.mxu0 %v780
      %1014 = vmatprep.subr.bf16.mxu0 %v789
      %1015 = vmatpush1.bf16.msra.mxu0 %v788
      %1016 = vmatprep.subr.bf16.mxu0 %v797
      %1017 = vmatpush1.bf16.msra.mxu0 %v796
      %1018 = vmatprep.subr.bf16.mxu0 %v805
      %1019 = vmatpush1.bf16.msra.mxu0 %v804
      %1020 = vmatprep.subr.bf16.mxu0 %v912
      %1021 = vmatpush1.bf16.msra.mxu0 %v909
      %1022 = vmatprep.subr.bf16.mxu0 0
      %1023 = vmatpush1.bf16.msra.mxu0 0
      %1024 = vmatprep.subr.bf16.mxu0 0
      %1025 = vmatpush1.bf16.msra.mxu0 0
      %1026 = vmatprep.subr.bf16.mxu0 0
      %1027 = vmatpush1.bf16.msra.mxu0 0
      %1028 = vmatprep.subr.bf16.mxu0 0
      %1029 = vmatpush1.bf16.msra.mxu0 0
      %1030 = vmatprep.subr.bf16.mxu0 0
      %1031 = vmatpush1.bf16.msra.mxu0 0
      %1032 = vmatprep.subr.bf16.mxu0 0
      %1033 = vmatpush1.bf16.msra.mxu0 0
      %1034 = vmatprep.mubr.bf16.mxu0 %v890
      %1035 = vmatmul.mubr.bf16.gmra.mrb[0].mxu0 %v464
      %v1036 = vpop.f32.mrb[0].mxu0
      %v1037 = vadd.f32 %v487, %v1036
      %v1038 = vpop.f32.mrb[0].mxu0
      %v1039 = vadd.f32 %v491, %v1038
      %v1040 = vpop.f32.mrb[0].mxu0
      %v1041 = vpop.f32.mrb[0].mxu0
      %1042 = vdwg.mxu0
      %1043 = vmatprep.subr.bf16.mxu0 %v743
      %1044 = vmatpush1.bf16.msra.mxu0 %v742
      %1045 = vmatprep.subr.bf16.mxu0 %v751
      %1046 = vmatpush1.bf16.msra.mxu0 %v750
      %1047 = vmatprep.subr.bf16.mxu0 %v759
      %1048 = vmatpush1.bf16.msra.mxu0 %v758
      %1049 = vmatprep.subr.bf16.mxu0 %v767
      %1050 = vmatpush1.bf16.msra.mxu0 %v766
      %1051 = vmatprep.subr.bf16.mxu0 %v775
      %1052 = vmatpush1.bf16.msra.mxu0 %v774
      %1053 = vmatprep.subr.bf16.mxu0 %v783
      %1054 = vmatpush1.bf16.msra.mxu0 %v782
      %1055 = vmatprep.subr.bf16.mxu0 %v791
      %1056 = vmatpush1.bf16.msra.mxu0 %v790
      %1057 = vmatprep.subr.bf16.mxu0 %v799
      %1058 = vmatpush1.bf16.msra.mxu0 %v798
      %1059 = vmatprep.subr.bf16.mxu0 %v807
      %1060 = vmatpush1.bf16.msra.mxu0 %v806
      %1061 = vmatprep.subr.bf16.mxu0 %v918
      %1062 = vmatpush1.bf16.msra.mxu0 %v915
      %1063 = vmatprep.subr.bf16.mxu0 0
      %1064 = vmatpush1.bf16.msra.mxu0 0
      %1065 = vmatprep.subr.bf16.mxu0 0
      %1066 = vmatpush1.bf16.msra.mxu0 0
      %1067 = vmatprep.subr.bf16.mxu0 0
      %1068 = vmatpush1.bf16.msra.mxu0 0
      %1069 = vmatprep.subr.bf16.mxu0 0
      %1070 = vmatpush1.bf16.msra.mxu0 0
      %1071 = vmatprep.subr.bf16.mxu0 0
      %1072 = vmatpush1.bf16.msra.mxu0 0
      %1073 = vmatprep.subr.bf16.mxu0 0
      %1074 = vmatpush1.bf16.msra.mxu0 0
      %1075 = vmatprep.mubr.bf16.mxu0 %v890
      %1076 = vmatmul.mubr.bf16.gmra.mrb[0].mxu0 %v464
      %v1077 = vpop.f32.mrb[0].mxu0
      %v1078 = vadd.f32 %v495, %v1077
      %v1079 = vpop.f32.mrb[0].mxu0
      %v1080 = vadd.f32 %v499, %v1079
      %v1081 = vpop.f32.mrb[0].mxu0
      %v1082 = vpop.f32.mrb[0].mxu0
      %1083 = vdwg.mxu0
      %v1084 = vmax.f32 %v955, 0.0
      %v1085 = vmax.f32 %v957, 0.0
      %v1086 = vmax.f32 %v996, 0.0
      %v1087 = vmax.f32 %v998, 0.0
      %v1088 = vmax.f32 %v1037, 0.0
      %v1089 = vmax.f32 %v1039, 0.0
      %v1090 = vmax.f32 %v1078, 0.0
      %v1091 = vmax.f32 %v1080, 0.0
      %v1092 = vmax.f32 %v1084, %v1086
      %v1093 = vmax.f32 %v1085, %v1087
      %v1094 = vmax.f32 %v1088, %v1090
      %v1095 = vmax.f32 %v1089, %v1091
      %v1096 = vmax.f32 %v1092, %v1094
      %v1097 = vmax.f32 %v1093, %v1095
      %v1098 = vld [vmem:[%s3] sm:$0xf]
      %v1099 = vld [vmem:[%s3 + $0x4] sm:$0xf]
      %v1100 = vld [vmem:[%s3 + $0x8] sm:$0xf]
      %v1101 = vld [vmem:[%s3 + $0xc] sm:$0xf]
      %v1102 = vld [vmem:[%s3 + $0x10] sm:$0xf]
      %v1103 = vld [vmem:[%s3 + $0x14] sm:$0xf]
      %v1104 = vld [vmem:[%s3 + $0x18] sm:$0xf]
      %v1105 = vld [vmem:[%s3 + $0x1c] sm:$0xf]
      %v1106 = vld [vmem:[%s3 + $0x20] sm:$0xf]
      %v1107 = vld [vmem:[%s3 + $0x24] sm:$0xf]
      %v1108 = vld [vmem:[%s3 + $0x28] sm:$0xf]
      %v1109 = vld [vmem:[%s3 + $0x2c] sm:$0xf]
      %v1110 = vld [vmem:[%s3 + $0x30] sm:$0xf]
      %v1111 = vld [vmem:[%s3 + $0x34] sm:$0xf]
      %v1112 = vld [vmem:[%s3 + $0x38] sm:$0xf]
      %v1113 = vld [vmem:[%s3 + $0x3c] sm:$0xf]
      %v1114 = vld [vmem:[%s3 + $0x40] sm:$0xf]
      %v1115 = vld [vmem:[%s3 + $0x44] sm:$0xf]
      %v1116 = vld [vmem:[%s3 + $0x48] sm:$0xf]
      %v1117 = vld [vmem:[%s3 + $0x4c] sm:$0xf]
      %v1118 = vld [vmem:[%s3 + $0x50] sm:$0xf]
      %v1119 = vld [vmem:[%s3 + $0x54] sm:$0xf]
      %v1120 = vld [vmem:[%s3 + $0x58] sm:$0xf]
      %v1121 = vld [vmem:[%s3 + $0x5c] sm:$0xf]
      %v1122 = vld [vmem:[%s3 + $0x60] sm:$0xf]
      %v1123 = vld [vmem:[%s3 + $0x64] sm:$0xf]
      %v1124 = vld [vmem:[%s3 + $0x68] sm:$0xf]
      %v1125 = vld [vmem:[%s3 + $0x6c] sm:$0xf]
      %v1126 = vld [vmem:[%s3 + $0x70] sm:$0xf]
      %v1127 = vld [vmem:[%s3 + $0x74] sm:$0xf]
      %v1128 = vld [vmem:[%s3 + $0x78] sm:$0xf]
      %v1129 = vld [vmem:[%s3 + $0x7c] sm:$0xf]
      %v1130 = vpack.c.bf16 %v1096, %v1096
      %v1131 = vpack.c.bf16 %v1097, %v1097
      %v1132 = vld [vmem:[%s4] sm:$0x1]
      %v1134 = vlaneseq
      %v1135 = vshrl.u32 %v1134, 7
      %v1136 = vsub.s32 0, %v1135
      %v1137 = vrot.slane %v1132, %v1136
      %v1171 = vunpack.c.l.b16 %v1098
      %v1172 = vunpack.c.l.b16 %v1099
      %v1173 = vunpack.c.l.b16 %v1100
      %v1174 = vunpack.c.l.b16 %v1101
      %v1175 = vunpack.c.l.b16 %v1102
      %v1176 = vunpack.c.l.b16 %v1103
      %v1177 = vunpack.c.l.b16 %v1104
      %v1178 = vunpack.c.l.b16 %v1105
      %v1179 = vunpack.c.l.b16 %v1106
      %v1180 = vunpack.c.l.b16 %v1107
      %v1181 = vunpack.c.l.b16 %v1108
      %v1182 = vunpack.c.l.b16 %v1109
      %v1183 = vunpack.c.l.b16 %v1110
      %v1184 = vunpack.c.l.b16 %v1111
      %v1185 = vunpack.c.l.b16 %v1112
      %v1186 = vunpack.c.l.b16 %v1113
      %v1187 = vunpack.c.l.b16 %v1114
      %v1188 = vunpack.c.l.b16 %v1115
      %v1189 = vunpack.c.l.b16 %v1116
      %v1190 = vunpack.c.l.b16 %v1117
      %v1191 = vunpack.c.l.b16 %v1118
      %v1192 = vunpack.c.l.b16 %v1119
      %v1193 = vunpack.c.l.b16 %v1120
      %v1194 = vunpack.c.l.b16 %v1121
      %v1195 = vunpack.c.l.b16 %v1122
      %v1196 = vunpack.c.l.b16 %v1123
      %v1197 = vunpack.c.l.b16 %v1124
      %v1198 = vunpack.c.l.b16 %v1125
      %v1199 = vunpack.c.l.b16 %v1126
      %v1200 = vunpack.c.l.b16 %v1127
      %v1201 = vunpack.c.l.b16 %v1128
      %v1202 = vunpack.c.l.b16 %v1129
      %v1203 = vpack.c.b16 %v1172, %v1171
      %v1204 = vpack.c.b16 %v1174, %v1173
      %v1205 = vpack.c.b16 %v1176, %v1175
      %v1206 = vpack.c.b16 %v1178, %v1177
      %v1207 = vpack.c.b16 %v1180, %v1179
      %v1208 = vpack.c.b16 %v1182, %v1181
      %v1209 = vpack.c.b16 %v1184, %v1183
      %v1210 = vpack.c.b16 %v1186, %v1185
      %v1211 = vpack.c.b16 %v1188, %v1187
      %v1212 = vpack.c.b16 %v1190, %v1189
      %v1213 = vpack.c.b16 %v1192, %v1191
      %v1214 = vpack.c.b16 %v1194, %v1193
      %v1215 = vpack.c.b16 %v1196, %v1195
      %v1216 = vpack.c.b16 %v1198, %v1197
      %v1217 = vpack.c.b16 %v1200, %v1199
      %v1218 = vpack.c.b16 %v1202, %v1201
      %1235 = vmatprep.subr.bf16.mxu0 0
      %1236 = vmatpush1.bf16.msra.mxu0 %v1203
      %1237 = vmatprep.subr.bf16.mxu0 0
      %1238 = vmatpush1.bf16.msra.mxu0 %v1204
      %1239 = vmatprep.subr.bf16.mxu0 0
      %1240 = vmatpush1.bf16.msra.mxu0 %v1205
      %1241 = vmatprep.subr.bf16.mxu0 0
      %1242 = vmatpush1.bf16.msra.mxu0 %v1206
      %1243 = vmatprep.subr.bf16.mxu0 0
      %1244 = vmatpush1.bf16.msra.mxu0 %v1207
      %1245 = vmatprep.subr.bf16.mxu0 0
      %1246 = vmatpush1.bf16.msra.mxu0 %v1208
      %1247 = vmatprep.subr.bf16.mxu0 0
      %1248 = vmatpush1.bf16.msra.mxu0 %v1209
      %1249 = vmatprep.subr.bf16.mxu0 0
      %1250 = vmatpush1.bf16.msra.mxu0 %v1210
      %1251 = vmatprep.subr.bf16.mxu0 0
      %1252 = vmatpush1.bf16.msra.mxu0 %v1211
      %1253 = vmatprep.subr.bf16.mxu0 0
      %1254 = vmatpush1.bf16.msra.mxu0 %v1212
      %1255 = vmatprep.subr.bf16.mxu0 0
      %1256 = vmatpush1.bf16.msra.mxu0 %v1213
      %1257 = vmatprep.subr.bf16.mxu0 0
      %1258 = vmatpush1.bf16.msra.mxu0 %v1214
      %1259 = vmatprep.subr.bf16.mxu0 0
      %1260 = vmatpush1.bf16.msra.mxu0 %v1215
      %1261 = vmatprep.subr.bf16.mxu0 0
      %1262 = vmatpush1.bf16.msra.mxu0 %v1216
      %1263 = vmatprep.subr.bf16.mxu0 0
      %1264 = vmatpush1.bf16.msra.mxu0 %v1217
      %1265 = vmatprep.subr.bf16.mxu0 0
      %1266 = vmatpush1.bf16.msra.mxu0 %v1218
      %1267 = vmatprep.mubr.bf16.mxu0 %v1131
      %1268 = vmatmul.mubr.bf16.gmra.mrb[0].mxu0 %v1130
      %v1269 = vpop.f32.mrb[0].mxu0
      %v1270 = vadd.f32 %v1137, %v1269
      %v1271 = vpop.f32.mrb[0].mxu0
      %v1272 = vpop.f32.mrb[0].mxu0
      %v1273 = vpop.f32.mrb[0].mxu0
      %1274 = vdwg.mxu0
      %v1275 = vmax.f32 %v1270, 0.0
      %v1276 = vld [vmem:[%s5] sm:$0xf]
      %v1277 = vld [vmem:[%s5 + $0x4] sm:$0xf]
      %v1278 = vld [vmem:[%s5 + $0x8] sm:$0xf]
      %v1279 = vld [vmem:[%s5 + $0xc] sm:$0xf]
      %v1280 = vld [vmem:[%s5 + $0x10] sm:$0xf]
      %v1281 = vld [vmem:[%s5 + $0x14] sm:$0xf]
      %v1282 = vld [vmem:[%s5 + $0x18] sm:$0xf]
      %v1283 = vld [vmem:[%s5 + $0x1c] sm:$0xf]
      %v1284 = vld [vmem:[%s5 + $0x20] sm:$0xf]
      %v1285 = vld [vmem:[%s5 + $0x24] sm:$0xf]
      %v1286 = vld [vmem:[%s5 + $0x28] sm:$0xf]
      %v1287 = vld [vmem:[%s5 + $0x2c] sm:$0xf]
      %v1288 = vld [vmem:[%s5 + $0x30] sm:$0xf]
      %v1289 = vld [vmem:[%s5 + $0x34] sm:$0xf]
      %v1290 = vld [vmem:[%s5 + $0x38] sm:$0xf]
      %v1291 = vld [vmem:[%s5 + $0x3c] sm:$0xf]
      %v1292 = vpack.c.bf16 %v1275, %v1275
      %v1293 = vld [vmem:[%s6] sm:$0x1]
      %v1295 = vlaneseq
      %v1296 = vshrl.u32 %v1295, 7
      %v1297 = vsub.s32 0, %v1296
      %v1298 = vrot.slane %v1293, %v1297
      %v1316 = vunpack.c.l.b16 %v1276
      %v1317 = vunpack.c.l.b16 %v1277
      %v1318 = vunpack.c.l.b16 %v1278
      %v1319 = vunpack.c.l.b16 %v1279
      %v1320 = vunpack.c.l.b16 %v1280
      %v1321 = vunpack.c.l.b16 %v1281
      %v1322 = vunpack.c.l.b16 %v1282
      %v1323 = vunpack.c.l.b16 %v1283
      %v1324 = vunpack.c.l.b16 %v1284
      %v1325 = vunpack.c.l.b16 %v1285
      %v1326 = vunpack.c.l.b16 %v1286
      %v1327 = vunpack.c.l.b16 %v1287
      %v1328 = vunpack.c.l.b16 %v1288
      %v1329 = vunpack.c.l.b16 %v1289
      %v1330 = vunpack.c.l.b16 %v1290
      %v1331 = vunpack.c.l.b16 %v1291
      %v1332 = vpack.c.b16 %v1317, %v1316
      %v1333 = vpack.c.b16 %v1319, %v1318
      %v1334 = vpack.c.b16 %v1321, %v1320
      %v1335 = vpack.c.b16 %v1323, %v1322
      %v1336 = vpack.c.b16 %v1325, %v1324
      %v1337 = vpack.c.b16 %v1327, %v1326
      %v1338 = vpack.c.b16 %v1329, %v1328
      %v1339 = vpack.c.b16 %v1331, %v1330
      %1348 = vmatprep.subr.bf16.mxu0 0
      %1349 = vmatpush1.bf16.msra.mxu0 %v1332
      %1350 = vmatprep.subr.bf16.mxu0 0
      %1351 = vmatpush1.bf16.msra.mxu0 %v1333
      %1352 = vmatprep.subr.bf16.mxu0 0
      %1353 = vmatpush1.bf16.msra.mxu0 %v1334
      %1354 = vmatprep.subr.bf16.mxu0 0
      %1355 = vmatpush1.bf16.msra.mxu0 %v1335
      %1356 = vmatprep.subr.bf16.mxu0 0
      %1357 = vmatpush1.bf16.msra.mxu0 %v1336
      %1358 = vmatprep.subr.bf16.mxu0 0
      %1359 = vmatpush1.bf16.msra.mxu0 %v1337
      %1360 = vmatprep.subr.bf16.mxu0 0
      %1361 = vmatpush1.bf16.msra.mxu0 %v1338
      %1362 = vmatprep.subr.bf16.mxu0 0
      %1363 = vmatpush1.bf16.msra.mxu0 %v1339
      %1364 = vmatprep.subr.bf16.mxu0 0
      %1365 = vmatpush1.bf16.msra.mxu0 0
      %1366 = vmatprep.subr.bf16.mxu0 0
      %1367 = vmatpush1.bf16.msra.mxu0 0
      %1368 = vmatprep.subr.bf16.mxu0 0
      %1369 = vmatpush1.bf16.msra.mxu0 0
      %1370 = vmatprep.subr.bf16.mxu0 0
      %1371 = vmatpush1.bf16.msra.mxu0 0
      %1372 = vmatprep.subr.bf16.mxu0 0
      %1373 = vmatpush1.bf16.msra.mxu0 0
      %1374 = vmatprep.subr.bf16.mxu0 0
      %1375 = vmatpush1.bf16.msra.mxu0 0
      %1376 = vmatprep.subr.bf16.mxu0 0
      %1377 = vmatpush1.bf16.msra.mxu0 0
      %1378 = vmatprep.subr.bf16.mxu0 0
      %1379 = vmatpush1.bf16.msra.mxu0 0
      %1380 = vmatprep.mubr.bf16.mxu0 0
      %1381 = vmatmul.mubr.bf16.gmra.mrb[0].mxu0 %v1292
      %v1382 = vpop.f32.mrb[0].mxu0
      %v1383 = vadd.f32 %v1298, %v1382
      %v1384 = vpop.f32.mrb[0].mxu0
      %v1385 = vpop.f32.mrb[0].mxu0
      %v1386 = vpop.f32.mrb[0].mxu0
      %1387 = vdwg.mxu0
      %v1388 = vmax.f32 %v1383, 0.0
      %v1389 = vld [vmem:[%s7] sm:$0xf]
      %v1390 = vld [vmem:[%s7 + $0x4] sm:$0xf]
      %v1391 = vld [vmem:[%s7 + $0x8] sm:$0xf]
      %v1392 = vld [vmem:[%s7 + $0xc] sm:$0xf]
      %v1393 = vld [vmem:[%s7 + $0x10] sm:$0xf]
      %v1394 = vld [vmem:[%s7 + $0x14] sm:$0xf]
      %v1395 = vld [vmem:[%s7 + $0x18] sm:$0xf]
      %v1396 = vld [vmem:[%s7 + $0x1c] sm:$0xf]
      %v1397 = vpack.c.bf16 %v1388, %v1388
      %v1398 = vld [vmem:[%s8] sm:$0x1]
      %v1400 = vlaneseq
      %v1401 = vshrl.u32 %v1400, 7
      %v1402 = vsub.s32 0, %v1401
      %v1403 = vrot.slane %v1398, %v1402
      %v1413 = vunpack.c.l.b16 %v1389
      %v1414 = vunpack.c.l.b16 %v1390
      %v1415 = vunpack.c.l.b16 %v1391
      %v1416 = vunpack.c.l.b16 %v1392
      %v1417 = vunpack.c.l.b16 %v1393
      %v1418 = vunpack.c.l.b16 %v1394
      %v1419 = vunpack.c.l.b16 %v1395
      %v1420 = vunpack.c.l.b16 %v1396
      %v1421 = vpack.c.b16 %v1414, %v1413
      %v1422 = vpack.c.b16 %v1416, %v1415
      %v1423 = vpack.c.b16 %v1418, %v1417
      %v1424 = vpack.c.b16 %v1420, %v1419
      %vm1429 = vcmask 523264
      %v1431 = vsel %vm1429, %v1397, 0
      %1433 = vmatprep.subr.bf16.mxu0 0
      %1434 = vmatpush1.bf16.msra.mxu0 %v1421
      %1435 = vmatprep.subr.bf16.mxu0 0
      %1436 = vmatpush1.bf16.msra.mxu0 %v1422
      %1437 = vmatprep.subr.bf16.mxu0 0
      %1438 = vmatpush1.bf16.msra.mxu0 %v1423
      %1439 = vmatprep.subr.bf16.mxu0 0
      %1440 = vmatpush1.bf16.msra.mxu0 %v1424
      %1441 = vmatprep.subr.bf16.mxu0 0
      %1442 = vmatpush1.bf16.msra.mxu0 0
      %1443 = vmatprep.subr.bf16.mxu0 0
      %1444 = vmatpush1.bf16.msra.mxu0 0
      %1445 = vmatprep.subr.bf16.mxu0 0
      %1446 = vmatpush1.bf16.msra.mxu0 0
      %1447 = vmatprep.subr.bf16.mxu0 0
      %1448 = vmatpush1.bf16.msra.mxu0 0
      %1449 = vmatprep.subr.bf16.mxu0 0
      %1450 = vmatpush1.bf16.msra.mxu0 0
      %1451 = vmatprep.subr.bf16.mxu0 0
      %1452 = vmatpush1.bf16.msra.mxu0 0
      %1453 = vmatprep.subr.bf16.mxu0 0
      %1454 = vmatpush1.bf16.msra.mxu0 0
      %1455 = vmatprep.subr.bf16.mxu0 0
      %1456 = vmatpush1.bf16.msra.mxu0 0
      %1457 = vmatprep.subr.bf16.mxu0 0
      %1458 = vmatpush1.bf16.msra.mxu0 0
      %1459 = vmatprep.subr.bf16.mxu0 0
      %1460 = vmatpush1.bf16.msra.mxu0 0
      %1461 = vmatprep.subr.bf16.mxu0 0
      %1462 = vmatpush1.bf16.msra.mxu0 0
      %1463 = vmatprep.subr.bf16.mxu0 0
      %1464 = vmatpush1.bf16.msra.mxu0 0
      %1465 = vmatprep.mubr.bf16.mxu0 0
      %1466 = vmatmul.mubr.bf16.gmra.mrb[0].mxu0 %v1431
      %v1467 = vpop.f32.mrb[0].mxu0
      %v1468 = vadd.f32 %v1403, %v1467
      %v1469 = vpop.f32.mrb[0].mxu0
      %v1470 = vpop.f32.mrb[0].mxu0
      %v1471 = vpop.f32.mrb[0].mxu0
      %1472 = vdwg.mxu0
      %v1473 = vtanh.pop %v1468
      %v1474 = vld [vmem:[%s9] sm:$0xf]
      %v1475 = vld [vmem:[%s9 + $0x4] sm:$0xf]
      %v1476 = vld [vmem:[%s9 + $0x8] sm:$0xf]
      %v1477 = vld [vmem:[%s9 + $0xc] sm:$0xf]
      %v1478 = vld [vmem:[%s9 + $0x10] sm:$0xf]
      %v1479 = vld [vmem:[%s9 + $0x14] sm:$0xf]
      %v1480 = vld [vmem:[%s9 + $0x18] sm:$0xf]
      %v1481 = vld [vmem:[%s9 + $0x1c] sm:$0xf]
      %v1482 = vld [vmem:[%s9 + $0x20] sm:$0xf]
      %v1483 = vld [vmem:[%s9 + $0x24] sm:$0xf]
      %v1484 = vld [vmem:[%s9 + $0x28] sm:$0xf]
      %v1485 = vld [vmem:[%s9 + $0x2c] sm:$0xf]
      %v1486 = vld [vmem:[%s9 + $0x30] sm:$0xf]
      %v1487 = vld [vmem:[%s9 + $0x34] sm:$0xf]
      %v1488 = vld [vmem:[%s9 + $0x38] sm:$0xf]
      %v1489 = vld [vmem:[%s9 + $0x3c] sm:$0xf]
      %v1490 = vpack.c.bf16 %v1473, %v1473
      %v1491 = vld [vmem:[%s10] sm:$0x1]
      %v1493 = vlaneseq
      %v1494 = vshrl.u32 %v1493, 7
      %v1495 = vsub.s32 0, %v1494
      %v1496 = vrot.slane %v1491, %v1495
      %v1514 = vunpack.c.l.b16 %v1474
      %v1515 = vunpack.c.l.b16 %v1475
      %v1516 = vunpack.c.l.b16 %v1476
      %v1517 = vunpack.c.l.b16 %v1477
      %v1518 = vunpack.c.l.b16 %v1478
      %v1519 = vunpack.c.l.b16 %v1479
      %v1520 = vunpack.c.l.b16 %v1480
      %v1521 = vunpack.c.l.b16 %v1481
      %v1522 = vunpack.c.l.b16 %v1482
      %v1523 = vunpack.c.l.b16 %v1483
      %v1524 = vunpack.c.l.b16 %v1484
      %v1525 = vunpack.c.l.b16 %v1485
      %v1526 = vunpack.c.l.b16 %v1486
      %v1527 = vunpack.c.l.b16 %v1487
      %v1528 = vunpack.c.l.b16 %v1488
      %v1529 = vunpack.c.l.b16 %v1489
      %v1530 = vpack.c.b16 %v1515, %v1514
      %v1531 = vpack.c.b16 %v1517, %v1516
      %v1532 = vpack.c.b16 %v1519, %v1518
      %v1533 = vpack.c.b16 %v1521, %v1520
      %v1534 = vpack.c.b16 %v1523, %v1522
      %v1535 = vpack.c.b16 %v1525, %v1524
      %v1536 = vpack.c.b16 %v1527, %v1526
      %v1537 = vpack.c.b16 %v1529, %v1528
      %1546 = vmatprep.subr.bf16.mxu0 0
      %1547 = vmatpush1.bf16.msra.mxu0 %v1530
      %1548 = vmatprep.subr.bf16.mxu0 0
      %1549 = vmatpush1.bf16.msra.mxu0 %v1531
      %1550 = vmatprep.subr.bf16.mxu0 0
      %1551 = vmatpush1.bf16.msra.mxu0 %v1532
      %1552 = vmatprep.subr.bf16.mxu0 0
      %1553 = vmatpush1.bf16.msra.mxu0 %v1533
      %1554 = vmatprep.subr.bf16.mxu0 0
      %1555 = vmatpush1.bf16.msra.mxu0 %v1534
      %1556 = vmatprep.subr.bf16.mxu0 0
      %1557 = vmatpush1.bf16.msra.mxu0 %v1535
      %1558 = vmatprep.subr.bf16.mxu0 0
      %1559 = vmatpush1.bf16.msra.mxu0 %v1536
      %1560 = vmatprep.subr.bf16.mxu0 0
      %1561 = vmatpush1.bf16.msra.mxu0 %v1537
      %1562 = vmatprep.subr.bf16.mxu0 0
      %1563 = vmatpush1.bf16.msra.mxu0 0
      %1564 = vmatprep.subr.bf16.mxu0 0
      %1565 = vmatpush1.bf16.msra.mxu0 0
      %1566 = vmatprep.subr.bf16.mxu0 0
      %1567 = vmatpush1.bf16.msra.mxu0 0
      %1568 = vmatprep.subr.bf16.mxu0 0
      %1569 = vmatpush1.bf16.msra.mxu0 0
      %1570 = vmatprep.subr.bf16.mxu0 0
      %1571 = vmatpush1.bf16.msra.mxu0 0
      %1572 = vmatprep.subr.bf16.mxu0 0
      %1573 = vmatpush1.bf16.msra.mxu0 0
      %1574 = vmatprep.subr.bf16.mxu0 0
      %1575 = vmatpush1.bf16.msra.mxu0 0
      %1576 = vmatprep.subr.bf16.mxu0 0
      %1577 = vmatpush1.bf16.msra.mxu0 0
      %1578 = vmatprep.mubr.bf16.mxu0 0
      %1579 = vmatmul.mubr.bf16.gmra.mrb[0].mxu0 %v1490
      %v1580 = vpop.f32.mrb[0].mxu0
      %v1581 = vadd.f32 %v1496, %v1580
      %v1582 = vpop.f32.mrb[0].mxu0
      %v1583 = vpop.f32.mrb[0].mxu0
      %v1584 = vpop.f32.mrb[0].mxu0
      %1585 = vdwg.mxu0
      %v1586 = vlaneseq
      %v1587 = vand.u32 %v1586, 127
      %vm1588 = vcmp.lt.s32.totalorder %v1587, 7
      %v1589 = vsel %vm1588, %v1581, -inf
      %1590 = vmax.xlane.f32.xlu0 %v1589
      %v1591 = vpop.xlane.xlu0 %1590
      %v1592 = vsub.f32 %v1589, %v1591
      %v1593 = vmul.f32 %v1592, 1.442695
      %v1594 = vpow.pop %v1593
      %1595 = vadd.xlane.f32.xlu0 %v1594
      %v1596 = vpop.xlane.xlu0 %1595
      %v1597 = vlog2.pop %v1596
      %v1598 = vmul.f32 %v1597, 0.6931472
      %v1599 = vadd.f32 %v1598, %v1591
      %v1600 = vsub.f32 %v1581, %v1599
      %v1601 = vsel %vm1588, %v1600, %v1581
      %1602 = vst [vmem:[%s384] sm:$0xff] %v1601
      %p1603 = scmp.lt.s32.totalorder %s22, 1
      %s1604 = scalar_select %p1603, %s22, 1
      %s1605 = smul.addr %s1604, 8
      %s1606 = scalar_lea.vmem %s11, %s1605
      // Predicated region
      $region65: #{acmodel_forward.1} parent=63 // pred_check
        %p1607 = pneg %p276
      $region66: #{acmodel_forward.1} parent=63 // pred_check_branch
        %1609 = sbr.rel (%p1607) target = $region68
      $region67: #{acmodel_forward.1} parent=63 // pred_region
        _
      $region68: #{acmodel_forward.1} parent=63 // pred_fallthru
        _
    $region64: #{acmodel_forward.1} parent=5 // pred_fallthru
      _
    %p1610 = scmp.le.s32.totalorder 2, %s17
    // Predicated region
    $region69: #{acmodel_forward.1} parent=5 // pred_check
      %p1611 = pneg %p1610
    $region70: #{acmodel_forward.1} parent=5 // pred_check_branch
      %1613 = sbr.rel (%p1611) target = $region72
    $region71: #{acmodel_forward.1} parent=5 // pred_region
      %s1614 = ssub.s32 %s17, 2
      // Predicated region
      $region73: #{acmodel_forward.1} parent=71 // pred_check
        %p1615 = pneg %p282
      $region74: #{acmodel_forward.1} parent=71 // pred_check_branch
        %1617 = sbr.rel (%p1615) target = $region76
      $region75: #{acmodel_forward.1} parent=71 // pred_region
        %p1618 = scmp.lt.s32.totalorder %s23, 1
        %s1619 = scalar_select %p1618, %s23, 1
        %s1620 = smul.addr %s1619, 8
        %s1621 = scalar_lea.vmem %s11, %s1620
      $region76: #{acmodel_forward.1} parent=71 // pred_fallthru
        _
    $region72: #{acmodel_forward.1} parent=5 // pred_fallthru
      _
  $region6: #{acmodel_forward.1} parent=0 // loop_footer
    %s21 = sadd.s32 1, %s17
  $region7: #{acmodel_forward.1} parent=0 // loop_footer_branch
    %16 = sbr.rel target = $region3
  $region8: #{acmodel_forward.1} parent=0 // loop_exit
    _

</llo_original>
